<compile_context>
chip_gen: v7x
topology: tpu7x:2x2x1
jax: 0.10.0
libtpu: 0.0.40
codegen_flags: <defaults>
</compile_context>

<pallas_src>
from functools import partial

import jax
import jax.numpy as jnp
import numpy as np
from jax.experimental import pallas as pl
from jax.experimental.pallas import tpu as pltpu

NEG_SLOPE = 0.2      # LeakyReLU(0.2)
BN_EPS = 1e-5        # torch BatchNorm1d default eps
HEAD_LANES = 128     # lane-dense output width for the fused heads


# ----------------------------------------------------------------------------- #
# In-kernel helpers                                                              #
# ----------------------------------------------------------------------------- #
def _lrelu(z):
    return jnp.where(z >= 0, z, NEG_SLOPE * z)


def _bn_lrelu(y, gamma, beta_rep, s_fold, u_unfold):
    """Training-mode BatchNorm1d + LeakyReLU on the position-major/channel-minor flat
    layout. Channel fold/unfold are tiny 0/1 matmuls (MXU); stats are centered (two-pass)
    in f32 accumulation, so no E[x^2]-E[x]^2 cancellation."""
    f32 = jnp.float32
    c = gamma.shape[1]
    lout = y.shape[1] // c
    inv_n = 1.0 / (y.shape[0] * lout)

    yf = jnp.dot(y, s_fold, preferred_element_type=f32)              # (B, C) per-row channel sums
    mean = jnp.sum(yf, axis=0, keepdims=True) * inv_n                # (1, C)
    mean_rep = jnp.dot(mean, u_unfold, preferred_element_type=f32)   # (1, lout*C) replicate
    d = y - mean_rep                                                 # centered activations
    vf = jnp.dot(d * d, s_fold, preferred_element_type=f32)          # (B, C)
    var = jnp.sum(vf, axis=0, keepdims=True) * inv_n                 # biased variance (torch training mode)
    a = gamma * jax.lax.rsqrt(var + BN_EPS)                          # (1, C)
    a_rep = jnp.dot(a, u_unfold, preferred_element_type=f32)         # (1, lout*C)
    return _lrelu(d * a_rep + beta_rep)


# ----------------------------------------------------------------------------- #
# The single fused Pallas kernel                                                 #
# ----------------------------------------------------------------------------- #
def _fused_discriminator_kernel(x_ref, m1_ref, b1_ref,
                                m2_ref, b2_ref, g2_ref, be2_ref, s2_ref, u2_ref,
                                m3_ref, b3_ref, g3_ref, be3_ref, s3_ref, u3_ref,
                                mh_ref, bh_ref, gsp_ref, o_ref,
                                *, aux_slices, total_aux):
    bf16 = jnp.bfloat16
    f32 = jnp.float32

    # conv1 (single MXU matmul on the flat layout) + pre-replicated bias + LeakyReLU
    h = jnp.dot(x_ref[...].astype(bf16), m1_ref[...], preferred_element_type=f32)
    h = _lrelu(h + b1_ref[...])

    # conv2 + BatchNorm1d + LeakyReLU
    h = jnp.dot(h.astype(bf16), m2_ref[...], preferred_element_type=f32) + b2_ref[...]
    h = _bn_lrelu(h, g2_ref[...], be2_ref[...], s2_ref[...], u2_ref[...])

    # conv3 + BatchNorm1d + LeakyReLU
    h = jnp.dot(h.astype(bf16), m3_ref[...], preferred_element_type=f32) + b3_ref[...]
    h = _bn_lrelu(h, g3_ref[...], be3_ref[...], s3_ref[...], u3_ref[...])

    # fused heads: one lane-dense (B, 128) logit slab
    y = jnp.dot(h.astype(bf16), mh_ref[...], preferred_element_type=f32) + bh_ref[...]
    lanes = jax.lax.broadcasted_iota(jnp.int32, y.shape, 1)
    aux_mask = (lanes >= 1) & (lanes < 1 + total_aux)

    # per-group max shift (numerical stability); static python loop over heads
    shift = jnp.zeros_like(y)
    for start, width in aux_slices:
        m = (lanes >= start) & (lanes < start + width)
        mx = jnp.max(jnp.where(m, y, -jnp.inf), axis=1, keepdims=True)
        shift = shift + jnp.where(m, mx, 0.0)

    e = jnp.exp(y - shift)                     # ONE exp for every aux head
    e_aux = jnp.where(aux_mask, e, 0.0)
    # all per-group softmax denominators at once via one (128,128) 0/1 matmul (MXU)
    denom = jnp.dot(e_aux, gsp_ref[...], preferred_element_type=f32)
    inv = pl.reciprocal(jnp.where(aux_mask, denom, 1.0), approx=False)
    softmax = e_aux * inv

    validity = 0.5 * (jnp.tanh(0.5 * y) + 1.0)  # stable sigmoid, ONE tanh (EUP)
    o_ref[...] = jnp.where(lanes == 0, validity, softmax)


# ----------------------------------------------------------------------------- #
# Parameter preparation (one-time weight-layout transforms, no per-forward cost) #
# ----------------------------------------------------------------------------- #
def _dense_conv_matrix(w, l_in, stride=2, pad=1):
    """Fold a torch-layout Conv1d weight (Cout, Cin, K) into a dense matrix acting on the
    position-major / channel-minor flat layout:
        out_flat[b, o*Cout + co] = in_flat[b, :] @ M[:, o*Cout + co]."""
    w_np = np.asarray(w, dtype=np.float32)
    cout, cin, k = w_np.shape
    l_out = (l_in + 2 * pad - k) // stride + 1
    m = np.zeros((l_in * cin, l_out * cout), np.float32)
    for o in range(l_out):
        for t in range(k):
            l = stride * o + t - pad
            if 0 <= l < l_in:
                m[l * cin:(l + 1) * cin, o * cout:(o + 1) * cout] = w_np[:, :, t].T
    return m


def _fold_unfold(lout, c):
    """0/1 channel fold (lout*C, C) and unfold (C, lout*C) matrices for the flat layout."""
    s = np.zeros((lout * c, c), np.float32)
    s[np.arange(lout * c), np.arange(lout * c) % c] = 1.0
    return s, np.ascontiguousarray(s.T)


def prepare_params(params, window_length, input_dim, base_channels, cond_vars):
    c1, c2, c3 = base_channels // 4, base_channels // 2, base_channels
    l0, l1, l2, l3 = window_length, window_length // 2, window_length // 4, window_length // 8

    m1 = jnp.asarray(_dense_conv_matrix(params["conv1_w"], l0), jnp.bfloat16)
    m2 = jnp.asarray(_dense_conv_matrix(params["conv2_w"], l1), jnp.bfloat16)
    m3 = jnp.asarray(_dense_conv_matrix(params["conv3_w"], l2), jnp.bfloat16)

    # Pre-replicated biases / BN betas (position-major) — no in-kernel lane concats.
    b1r = np.tile(np.asarray(params["conv1_b"], np.float32), (1, l1))
    b2r = np.tile(np.asarray(params["conv2_b"], np.float32), (1, l2))
    b3r = np.tile(np.asarray(params["conv3_b"], np.float32), (1, l3))
    be2r = np.tile(np.asarray(params["bn2_b"], np.float32), (1, l2))
    be3r = np.tile(np.asarray(params["bn3_b"], np.float32), (1, l3))

    s2, u2 = _fold_unfold(l2, c2)
    s3, u3 = _fold_unfold(l3, c3)

    # Fuse all heads into one weight; fold torch's channel-major flatten (row c*L3+l)
    # into a row permutation to our position-major layout (row l*C3+c); pad the output
    # axis up to a lane-dense multiple of 128.
    names = list(cond_vars.keys())
    wh = np.concatenate([np.asarray(params["fc_w"], np.float32)]
                        + [np.asarray(params["aux"][n]["w"], np.float32) for n in names], axis=1)
    bh = np.concatenate([np.asarray(params["fc_b"], np.float32)]
                        + [np.asarray(params["aux"][n]["b"], np.float32) for n in names], axis=1)
    r_new = np.arange(l3 * c3)
    perm = (r_new % c3) * l3 + r_new // c3            # torch row feeding flat row r_new
    wh = wh[perm, :]
    n_cols = wh.shape[1]
    n_pad = max(HEAD_LANES, -(-n_cols // HEAD_LANES) * HEAD_LANES)
    wh = np.pad(wh, ((0, 0), (0, n_pad - n_cols)))
    bh = np.pad(bh, ((0, 0), (0, n_pad - n_cols)))

    aux_layout, start = [], 1
    for n in names:
        aux_layout.append((n, start, int(cond_vars[n])))
        start += int(cond_vars[n])
    total_aux = start - 1

    # Group-spread matrix: denom[:, j] = sum of e over the aux group containing lane j.
    gsp = np.zeros((n_pad, n_pad), np.float32)
    for _, s0, w0 in aux_layout:
        gsp[s0:s0 + w0, s0:s0 + w0] = 1.0

    inputs = (
        m1, jnp.asarray(b1r, jnp.float32),
        m2, jnp.asarray(b2r, jnp.float32),
        jnp.asarray(params["bn2_g"], jnp.float32), jnp.asarray(be2r, jnp.float32),
        jnp.asarray(s2, jnp.float32), jnp.asarray(u2, jnp.float32),
        m3, jnp.asarray(b3r, jnp.float32),
        jnp.asarray(params["bn3_g"], jnp.float32), jnp.asarray(be3r, jnp.float32),
        jnp.asarray(s3, jnp.float32), jnp.asarray(u3, jnp.float32),
        jnp.asarray(wh, jnp.bfloat16), jnp.asarray(bh, jnp.float32),
        jnp.asarray(gsp, jnp.float32),
    )
    meta = {"n_pad": n_pad, "aux_layout": tuple(aux_layout), "total_aux": total_aux,
            "dims": (l0, l1, l2, l3, input_dim, c1, c2, c3)}
    return {"inputs": inputs, "meta": meta}


# ----------------------------------------------------------------------------- #
# Forward pass: ONE pallas_call for the entire module                            #
# ----------------------------------------------------------------------------- #
def discriminator_forward(prepped, x):
    # x: (B, window_length, input_dim), float32
    B, L, Cin = x.shape
    meta = prepped["meta"]
    x_flat = x.reshape(B, L * Cin)                      # position-major / channel-minor
    args = (x_flat,) + prepped["inputs"]

    aux_slices = tuple((s, w) for _, s, w in meta["aux_layout"])
    kernel = partial(_fused_discriminator_kernel,
                     aux_slices=aux_slices, total_aux=meta["total_aux"])

    def full_spec(shape):
        nd = len(shape)
        return pl.BlockSpec(shape, lambda i, nd=nd: (0,) * nd)

    l0, l1, l2, l3, cin, c1, c2, c3 = meta["dims"]
    n_pad = meta["n_pad"]
    flops = 2 * B * (l0 * cin * l1 * c1 + l1 * c1 * l2 * c2 + l2 * c2 * l3 * c3 + l3 * c3 * n_pad)
    transcendentals = 3 * B * n_pad                      # exp + tanh slabs (+ rsqrt, rounded up)
    bytes_accessed = int(sum(int(a.size) * a.dtype.itemsize for a in args) + B * n_pad * 4)

    out = pl.pallas_call(
        kernel,
        grid=(1,),
        in_specs=[full_spec(a.shape) for a in args],
        out_specs=full_spec((B, n_pad)),
        out_shape=jax.ShapeDtypeStruct((B, n_pad), jnp.float32),
        compiler_params=pltpu.CompilerParams(
            dimension_semantics=("arbitrary",),
            vmem_limit_bytes=32 * 1024 * 1024),
        cost_estimate=pl.CostEstimate(flops=int(flops),
                                      transcendentals=int(transcendentals),
                                      bytes_accessed=bytes_accessed),
    )(*args)

    validity = out[:, 0:1]
    aux_outputs = {name: out[:, s:s + w] for name, s, w in meta["aux_layout"]}
    return validity, aux_outputs


# ----------------------------------------------------------------------------- #
# Parameters (deterministic synthetic init; torch layouts kept)                  #
# ----------------------------------------------------------------------------- #
def init_params(key, window_length, input_dim, cond_vars, base_channels):
    c1, c2, c3 = base_channels // 4, base_channels // 2, base_channels
    ks = jax.random.split(key, 10)

    def w(k, shape, s=0.1):
        return (s * jax.random.normal(k, shape)).astype(jnp.float32)

    params = {
        "conv1_w": w(ks[0], (c1, input_dim, 4)),
        "conv1_b": w(ks[1], (1, c1), 0.05),
        "conv2_w": w(ks[2], (c2, c1, 4)),
        "conv2_b": w(ks[3], (1, c2), 0.05),
        "bn2_g": jnp.ones((1, c2), jnp.float32),
        "bn2_b": jnp.zeros((1, c2), jnp.float32),
        "conv3_w": w(ks[4], (c3, c2, 4)),
        "conv3_b": w(ks[5], (1, c3), 0.05),
        "bn3_g": jnp.ones((1, c3), jnp.float32),
        "bn3_b": jnp.zeros((1, c3), jnp.float32),
    }
    d = window_length // 8 * base_channels
    params["fc_w"] = w(ks[6], (d, 1))
    params["fc_b"] = w(ks[7], (1, 1), 0.05)
    params["aux"] = {}
    akeys = jax.random.split(ks[8], 2 * max(len(cond_vars), 1))
    for i, (name, ncls) in enumerate(cond_vars.items()):
        params["aux"][name] = {
            "w": w(akeys[2 * i], (d, ncls)),
            "b": w(akeys[2 * i + 1], (1, ncls), 0.05),
        }
    return params


# ----------------------------------------------------------------------------- #
# Pure-JAX (lax.conv) reference mirroring the torch forward, for verification    #
# ----------------------------------------------------------------------------- #
def _torch_like_reference(params, x):
    prec = jax.lax.Precision.HIGHEST
    xt = jnp.transpose(x, (0, 2, 1))  # NCL, like x.permute(0, 2, 1)

    def conv(xn, w, b):
        y = jax.lax.conv_general_dilated(
            xn, w, window_strides=(2,), padding=[(1, 1)],
            dimension_numbers=("NCH", "OIH", "NCH"), precision=prec)
        return y + b.reshape(1, -1, 1)

    def lrelu(y):
        return jnp.where(y >= 0, y, NEG_SLOPE * y)

    def bn(y, g, be):
        mean = jnp.mean(y, axis=(0, 2), keepdims=True)
        var = jnp.mean(jnp.square(y - mean), axis=(0, 2), keepdims=True)
        return (y - mean) * jax.lax.rsqrt(var + BN_EPS) * g.reshape(1, -1, 1) + be.reshape(1, -1, 1)

    h = lrelu(conv(xt, params["conv1_w"], params["conv1_b"]))
    h = lrelu(bn(conv(h, params["conv2_w"], params["conv2_b"]), params["bn2_g"], params["bn2_b"]))
    h = lrelu(bn(conv(h, params["conv3_w"], params["conv3_b"]), params["bn3_g"], params["bn3_b"]))
    flat = h.reshape(h.shape[0], -1)
    validity = jax.nn.sigmoid(jnp.dot(flat, params["fc_w"], precision=prec) + params["fc_b"])
    aux = {name: jax.nn.softmax(jnp.dot(flat, p["w"], precision=prec) + p["b"], axis=1)
           for name, p in params["aux"].items()}
    return validity, aux


if __name__ == "__main__":
    # Small shapes consistent with the module: window_length divisible by 8.
    B, window_length, input_dim, base_channels = 2, 16, 4, 32
    cond_vars = {"month": 5, "weekday": 3}

    key = jax.random.PRNGKey(0)
    pkey, xkey = jax.random.split(key)
    params = init_params(pkey, window_length, input_dim, cond_vars, base_channels)
    prepped = prepare_params(params, window_length, input_dim, base_channels, cond_vars)
    x = jax.random.normal(xkey, (B, window_length, input_dim), dtype=jnp.float32)

    validity, aux = discriminator_forward(prepped, x)
    validity = jax.block_until_ready(validity)
    aux = {k: jax.block_until_ready(v) for k, v in aux.items()}

    # Verify against the f32 HIGHEST-precision reference (kernel uses bf16 MXU operands for
    # the conv/head matmuls, so tolerances are slightly looser than pure-f32).
    ref_v, ref_aux = _torch_like_reference(params, x)
    np.testing.assert_allclose(np.asarray(validity), np.asarray(ref_v), rtol=4e-2, atol=8e-3)
    for k in aux:
        np.testing.assert_allclose(np.asarray(aux[k]), np.asarray(ref_aux[k]), rtol=4e-2, atol=8e-3)

    assert validity.shape == (B, 1)
    for name, ncls in cond_vars.items():
        assert aux[name].shape == (B, ncls)

    print("KERNEL_OK")
</pallas_src>

<mosaic_0001>
module attributes {stable_mosaic.version = 11 : i64} {
  func.func @_fused_discriminator_kernel(%arg0: i32, %arg1: memref<2x64xf32, #tpu.memory_space<vmem>>, %arg2: memref<64x64xbf16, #tpu.memory_space<vmem>>, %arg3: memref<1x64xf32, #tpu.memory_space<vmem>>, %arg4: memref<64x64xbf16, #tpu.memory_space<vmem>>, %arg5: memref<1x64xf32, #tpu.memory_space<vmem>>, %arg6: memref<1x16xf32, #tpu.memory_space<vmem>>, %arg7: memref<1x64xf32, #tpu.memory_space<vmem>>, %arg8: memref<64x16xf32, #tpu.memory_space<vmem>>, %arg9: memref<16x64xf32, #tpu.memory_space<vmem>>, %arg10: memref<64x64xbf16, #tpu.memory_space<vmem>>, %arg11: memref<1x64xf32, #tpu.memory_space<vmem>>, %arg12: memref<1x32xf32, #tpu.memory_space<vmem>>, %arg13: memref<1x64xf32, #tpu.memory_space<vmem>>, %arg14: memref<64x32xf32, #tpu.memory_space<vmem>>, %arg15: memref<32x64xf32, #tpu.memory_space<vmem>>, %arg16: memref<64x128xbf16, #tpu.memory_space<vmem>>, %arg17: memref<1x128xf32, #tpu.memory_space<vmem>>, %arg18: memref<128x128xf32, #tpu.memory_space<vmem>>, %arg19: memref<2x128xf32, #tpu.memory_space<vmem>>) attributes {dimension_semantics = [#tpu.dimension_semantics<arbitrary>], iteration_bounds = array<i64: 1>, scalar_prefetch = 0 : i64, scratch_operands = 0 : i64, tpu.core_type = #tpu.core_type<tc>, window_params = [{pipeline_mode = #tpu.pipeline_mode<synchronous>, transform_indices = @transform_0, window_bounds = array<i64: 2, 64>}, {pipeline_mode = #tpu.pipeline_mode<synchronous>, transform_indices = @transform_1, window_bounds = array<i64: 64, 64>}, {pipeline_mode = #tpu.pipeline_mode<synchronous>, transform_indices = @transform_2, window_bounds = array<i64: 1, 64>}, {pipeline_mode = #tpu.pipeline_mode<synchronous>, transform_indices = @transform_3, window_bounds = array<i64: 64, 64>}, {pipeline_mode = #tpu.pipeline_mode<synchronous>, transform_indices = @transform_4, window_bounds = array<i64: 1, 64>}, {pipeline_mode = #tpu.pipeline_mode<synchronous>, transform_indices = @transform_5, window_bounds = array<i64: 1, 16>}, {pipeline_mode = #tpu.pipeline_mode<synchronous>, transform_indices = @transform_6, window_bounds = array<i64: 1, 64>}, {pipeline_mode = #tpu.pipeline_mode<synchronous>, transform_indices = @transform_7, window_bounds = array<i64: 64, 16>}, {pipeline_mode = #tpu.pipeline_mode<synchronous>, transform_indices = @transform_8, window_bounds = array<i64: 16, 64>}, {pipeline_mode = #tpu.pipeline_mode<synchronous>, transform_indices = @transform_9, window_bounds = array<i64: 64, 64>}, {pipeline_mode = #tpu.pipeline_mode<synchronous>, transform_indices = @transform_10, window_bounds = array<i64: 1, 64>}, {pipeline_mode = #tpu.pipeline_mode<synchronous>, transform_indices = @transform_11, window_bounds = array<i64: 1, 32>}, {pipeline_mode = #tpu.pipeline_mode<synchronous>, transform_indices = @transform_12, window_bounds = array<i64: 1, 64>}, {pipeline_mode = #tpu.pipeline_mode<synchronous>, transform_indices = @transform_13, window_bounds = array<i64: 64, 32>}, {pipeline_mode = #tpu.pipeline_mode<synchronous>, transform_indices = @transform_14, window_bounds = array<i64: 32, 64>}, {pipeline_mode = #tpu.pipeline_mode<synchronous>, transform_indices = @transform_15, window_bounds = array<i64: 64, 128>}, {pipeline_mode = #tpu.pipeline_mode<synchronous>, transform_indices = @transform_16, window_bounds = array<i64: 1, 128>}, {pipeline_mode = #tpu.pipeline_mode<synchronous>, transform_indices = @transform_17, window_bounds = array<i64: 128, 128>}, {pipeline_mode = #tpu.pipeline_mode<synchronous>, transform_indices = @transform_18, window_bounds = array<i64: 2, 128>}]} {
    %c0 = arith.constant 0 : index
    %c0_0 = arith.constant 0 : index
    %0 = vector.load %arg1[%c0, %c0_0] : memref<2x64xf32, #tpu.memory_space<vmem>>, vector<2x64xf32>
    %1 = arith.truncf %0 : vector<2x64xf32> to vector<2x64xbf16>
    %c0_1 = arith.constant 0 : index
    %c0_2 = arith.constant 0 : index
    %2 = vector.load %arg2[%c0_1, %c0_2] : memref<64x64xbf16, #tpu.memory_space<vmem>>, vector<64x64xbf16>
    %cst = arith.constant dense<0.000000e+00> : vector<2x64xf32>
    %3 = tpu.matmul %1, %2, %cst {dimension_numbers = #tpu.dot_dimension_numbers<[1], [0], [0], [1], [0, 0, 1, 1], [], []>} : vector<2x64xbf16>, vector<64x64xbf16>, vector<2x64xf32> -> vector<2x64xf32>
    %c0_3 = arith.constant 0 : index
    %c0_4 = arith.constant 0 : index
    %4 = vector.load %arg3[%c0_3, %c0_4] : memref<1x64xf32, #tpu.memory_space<vmem>>, vector<1x64xf32>
    %5 = vector.broadcast %4 : vector<1x64xf32> to vector<2x64xf32>
    %6 = arith.addf %3, %5 : vector<2x64xf32>
    %cst_5 = arith.constant 0.000000e+00 : f32
    %7 = vector.broadcast %cst_5 : f32 to vector<2x64xf32>
    %8 = arith.cmpf oge, %6, %7 : vector<2x64xf32>
    %cst_6 = arith.constant 2.000000e-01 : f32
    %9 = vector.broadcast %cst_6 : f32 to vector<2x64xf32>
    %10 = arith.mulf %9, %6 : vector<2x64xf32>
    %11 = arith.select %8, %6, %10 : vector<2x64xi1>, vector<2x64xf32>
    %12 = arith.truncf %11 : vector<2x64xf32> to vector<2x64xbf16>
    %c0_7 = arith.constant 0 : index
    %c0_8 = arith.constant 0 : index
    %13 = vector.load %arg4[%c0_7, %c0_8] : memref<64x64xbf16, #tpu.memory_space<vmem>>, vector<64x64xbf16>
    %cst_9 = arith.constant dense<0.000000e+00> : vector<2x64xf32>
    %14 = tpu.matmul %12, %13, %cst_9 {dimension_numbers = #tpu.dot_dimension_numbers<[1], [0], [0], [1], [0, 0, 1, 1], [], []>} : vector<2x64xbf16>, vector<64x64xbf16>, vector<2x64xf32> -> vector<2x64xf32>
    %c0_10 = arith.constant 0 : index
    %c0_11 = arith.constant 0 : index
    %15 = vector.load %arg5[%c0_10, %c0_11] : memref<1x64xf32, #tpu.memory_space<vmem>>, vector<1x64xf32>
    %16 = vector.broadcast %15 : vector<1x64xf32> to vector<2x64xf32>
    %17 = arith.addf %14, %16 : vector<2x64xf32>
    %c0_12 = arith.constant 0 : index
    %c0_13 = arith.constant 0 : index
    %18 = vector.load %arg6[%c0_12, %c0_13] : memref<1x16xf32, #tpu.memory_space<vmem>>, vector<1x16xf32>
    %c0_14 = arith.constant 0 : index
    %c0_15 = arith.constant 0 : index
    %19 = vector.load %arg7[%c0_14, %c0_15] : memref<1x64xf32, #tpu.memory_space<vmem>>, vector<1x64xf32>
    %c0_16 = arith.constant 0 : index
    %c0_17 = arith.constant 0 : index
    %20 = vector.load %arg8[%c0_16, %c0_17] : memref<64x16xf32, #tpu.memory_space<vmem>>, vector<64x16xf32>
    %c0_18 = arith.constant 0 : index
    %c0_19 = arith.constant 0 : index
    %21 = vector.load %arg9[%c0_18, %c0_19] : memref<16x64xf32, #tpu.memory_space<vmem>>, vector<16x64xf32>
    %cst_20 = arith.constant dense<0.000000e+00> : vector<2x16xf32>
    %22 = tpu.matmul %17, %20, %cst_20 {dimension_numbers = #tpu.dot_dimension_numbers<[1], [0], [0], [1], [0, 0, 1, 1], [], []>} : vector<2x64xf32>, vector<64x16xf32>, vector<2x16xf32> -> vector<2x16xf32>
    %cst_21 = arith.constant dense<0.000000e+00> : vector<16xf32>
    %23 = vector.multi_reduction <add>, %22, %cst_21 [0] : vector<2x16xf32> to vector<16xf32>
    %24 = vector.shape_cast %23 : vector<16xf32> to vector<1x16xf32>
    %cst_22 = arith.constant 1.250000e-01 : f32
    %25 = vector.broadcast %cst_22 : f32 to vector<1x16xf32>
    %26 = arith.mulf %24, %25 : vector<1x16xf32>
    %cst_23 = arith.constant dense<0.000000e+00> : vector<1x64xf32>
    %27 = tpu.matmul %26, %21, %cst_23 {dimension_numbers = #tpu.dot_dimension_numbers<[1], [0], [0], [1], [0, 0, 1, 1], [], []>} : vector<1x16xf32>, vector<16x64xf32>, vector<1x64xf32> -> vector<1x64xf32>
    %28 = vector.broadcast %27 : vector<1x64xf32> to vector<2x64xf32>
    %29 = arith.subf %17, %28 : vector<2x64xf32>
    %30 = arith.mulf %29, %29 : vector<2x64xf32>
    %cst_24 = arith.constant dense<0.000000e+00> : vector<2x16xf32>
    %31 = tpu.matmul %30, %20, %cst_24 {dimension_numbers = #tpu.dot_dimension_numbers<[1], [0], [0], [1], [0, 0, 1, 1], [], []>} : vector<2x64xf32>, vector<64x16xf32>, vector<2x16xf32> -> vector<2x16xf32>
    %cst_25 = arith.constant dense<0.000000e+00> : vector<16xf32>
    %32 = vector.multi_reduction <add>, %31, %cst_25 [0] : vector<2x16xf32> to vector<16xf32>
    %33 = vector.shape_cast %32 : vector<16xf32> to vector<1x16xf32>
    %cst_26 = arith.constant 1.250000e-01 : f32
    %34 = vector.broadcast %cst_26 : f32 to vector<1x16xf32>
    %35 = arith.mulf %33, %34 : vector<1x16xf32>
    %cst_27 = arith.constant 9.99999974E-6 : f32
    %36 = vector.broadcast %cst_27 : f32 to vector<1x16xf32>
    %37 = arith.addf %35, %36 : vector<1x16xf32>
    %38 = math.rsqrt %37 : vector<1x16xf32>
    %39 = arith.mulf %18, %38 : vector<1x16xf32>
    %cst_28 = arith.constant dense<0.000000e+00> : vector<1x64xf32>
    %40 = tpu.matmul %39, %21, %cst_28 {dimension_numbers = #tpu.dot_dimension_numbers<[1], [0], [0], [1], [0, 0, 1, 1], [], []>} : vector<1x16xf32>, vector<16x64xf32>, vector<1x64xf32> -> vector<1x64xf32>
    %41 = vector.broadcast %40 : vector<1x64xf32> to vector<2x64xf32>
    %42 = arith.mulf %29, %41 : vector<2x64xf32>
    %43 = vector.broadcast %19 : vector<1x64xf32> to vector<2x64xf32>
    %44 = arith.addf %42, %43 : vector<2x64xf32>
    %cst_29 = arith.constant 0.000000e+00 : f32
    %45 = vector.broadcast %cst_29 : f32 to vector<2x64xf32>
    %46 = arith.cmpf oge, %44, %45 : vector<2x64xf32>
    %cst_30 = arith.constant 2.000000e-01 : f32
    %47 = vector.broadcast %cst_30 : f32 to vector<2x64xf32>
    %48 = arith.mulf %47, %44 : vector<2x64xf32>
    %49 = arith.select %46, %44, %48 : vector<2x64xi1>, vector<2x64xf32>
    %50 = arith.truncf %49 : vector<2x64xf32> to vector<2x64xbf16>
    %c0_31 = arith.constant 0 : index
    %c0_32 = arith.constant 0 : index
    %51 = vector.load %arg10[%c0_31, %c0_32] : memref<64x64xbf16, #tpu.memory_space<vmem>>, vector<64x64xbf16>
    %cst_33 = arith.constant dense<0.000000e+00> : vector<2x64xf32>
    %52 = tpu.matmul %50, %51, %cst_33 {dimension_numbers = #tpu.dot_dimension_numbers<[1], [0], [0], [1], [0, 0, 1, 1], [], []>} : vector<2x64xbf16>, vector<64x64xbf16>, vector<2x64xf32> -> vector<2x64xf32>
    %c0_34 = arith.constant 0 : index
    %c0_35 = arith.constant 0 : index
    %53 = vector.load %arg11[%c0_34, %c0_35] : memref<1x64xf32, #tpu.memory_space<vmem>>, vector<1x64xf32>
    %54 = vector.broadcast %53 : vector<1x64xf32> to vector<2x64xf32>
    %55 = arith.addf %52, %54 : vector<2x64xf32>
    %c0_36 = arith.constant 0 : index
    %c0_37 = arith.constant 0 : index
    %56 = vector.load %arg12[%c0_36, %c0_37] : memref<1x32xf32, #tpu.memory_space<vmem>>, vector<1x32xf32>
    %c0_38 = arith.constant 0 : index
    %c0_39 = arith.constant 0 : index
    %57 = vector.load %arg13[%c0_38, %c0_39] : memref<1x64xf32, #tpu.memory_space<vmem>>, vector<1x64xf32>
    %c0_40 = arith.constant 0 : index
    %c0_41 = arith.constant 0 : index
    %58 = vector.load %arg14[%c0_40, %c0_41] : memref<64x32xf32, #tpu.memory_space<vmem>>, vector<64x32xf32>
    %c0_42 = arith.constant 0 : index
    %c0_43 = arith.constant 0 : index
    %59 = vector.load %arg15[%c0_42, %c0_43] : memref<32x64xf32, #tpu.memory_space<vmem>>, vector<32x64xf32>
    %cst_44 = arith.constant dense<0.000000e+00> : vector<2x32xf32>
    %60 = tpu.matmul %55, %58, %cst_44 {dimension_numbers = #tpu.dot_dimension_numbers<[1], [0], [0], [1], [0, 0, 1, 1], [], []>} : vector<2x64xf32>, vector<64x32xf32>, vector<2x32xf32> -> vector<2x32xf32>
    %cst_45 = arith.constant dense<0.000000e+00> : vector<32xf32>
    %61 = vector.multi_reduction <add>, %60, %cst_45 [0] : vector<2x32xf32> to vector<32xf32>
    %62 = vector.shape_cast %61 : vector<32xf32> to vector<1x32xf32>
    %cst_46 = arith.constant 2.500000e-01 : f32
    %63 = vector.broadcast %cst_46 : f32 to vector<1x32xf32>
    %64 = arith.mulf %62, %63 : vector<1x32xf32>
    %cst_47 = arith.constant dense<0.000000e+00> : vector<1x64xf32>
    %65 = tpu.matmul %64, %59, %cst_47 {dimension_numbers = #tpu.dot_dimension_numbers<[1], [0], [0], [1], [0, 0, 1, 1], [], []>} : vector<1x32xf32>, vector<32x64xf32>, vector<1x64xf32> -> vector<1x64xf32>
    %66 = vector.broadcast %65 : vector<1x64xf32> to vector<2x64xf32>
    %67 = arith.subf %55, %66 : vector<2x64xf32>
    %68 = arith.mulf %67, %67 : vector<2x64xf32>
    %cst_48 = arith.constant dense<0.000000e+00> : vector<2x32xf32>
    %69 = tpu.matmul %68, %58, %cst_48 {dimension_numbers = #tpu.dot_dimension_numbers<[1], [0], [0], [1], [0, 0, 1, 1], [], []>} : vector<2x64xf32>, vector<64x32xf32>, vector<2x32xf32> -> vector<2x32xf32>
    %cst_49 = arith.constant dense<0.000000e+00> : vector<32xf32>
    %70 = vector.multi_reduction <add>, %69, %cst_49 [0] : vector<2x32xf32> to vector<32xf32>
    %71 = vector.shape_cast %70 : vector<32xf32> to vector<1x32xf32>
    %cst_50 = arith.constant 2.500000e-01 : f32
    %72 = vector.broadcast %cst_50 : f32 to vector<1x32xf32>
    %73 = arith.mulf %71, %72 : vector<1x32xf32>
    %cst_51 = arith.constant 9.99999974E-6 : f32
    %74 = vector.broadcast %cst_51 : f32 to vector<1x32xf32>
    %75 = arith.addf %73, %74 : vector<1x32xf32>
    %76 = math.rsqrt %75 : vector<1x32xf32>
    %77 = arith.mulf %56, %76 : vector<1x32xf32>
    %cst_52 = arith.constant dense<0.000000e+00> : vector<1x64xf32>
    %78 = tpu.matmul %77, %59, %cst_52 {dimension_numbers = #tpu.dot_dimension_numbers<[1], [0], [0], [1], [0, 0, 1, 1], [], []>} : vector<1x32xf32>, vector<32x64xf32>, vector<1x64xf32> -> vector<1x64xf32>
    %79 = vector.broadcast %78 : vector<1x64xf32> to vector<2x64xf32>
    %80 = arith.mulf %67, %79 : vector<2x64xf32>
    %81 = vector.broadcast %57 : vector<1x64xf32> to vector<2x64xf32>
    %82 = arith.addf %80, %81 : vector<2x64xf32>
    %cst_53 = arith.constant 0.000000e+00 : f32
    %83 = vector.broadcast %cst_53 : f32 to vector<2x64xf32>
    %84 = arith.cmpf oge, %82, %83 : vector<2x64xf32>
    %cst_54 = arith.constant 2.000000e-01 : f32
    %85 = vector.broadcast %cst_54 : f32 to vector<2x64xf32>
    %86 = arith.mulf %85, %82 : vector<2x64xf32>
    %87 = arith.select %84, %82, %86 : vector<2x64xi1>, vector<2x64xf32>
    %88 = arith.truncf %87 : vector<2x64xf32> to vector<2x64xbf16>
    %c0_55 = arith.constant 0 : index
    %c0_56 = arith.constant 0 : index
    %89 = vector.load %arg16[%c0_55, %c0_56] : memref<64x128xbf16, #tpu.memory_space<vmem>>, vector<64x128xbf16>
    %cst_57 = arith.constant dense<0.000000e+00> : vector<2x128xf32>
    %90 = tpu.matmul %88, %89, %cst_57 {dimension_numbers = #tpu.dot_dimension_numbers<[1], [0], [0], [1], [0, 0, 1, 1], [], []>} : vector<2x64xbf16>, vector<64x128xbf16>, vector<2x128xf32> -> vector<2x128xf32>
    %c0_58 = arith.constant 0 : index
    %c0_59 = arith.constant 0 : index
    %91 = vector.load %arg17[%c0_58, %c0_59] : memref<1x128xf32, #tpu.memory_space<vmem>>, vector<1x128xf32>
    %92 = vector.broadcast %91 : vector<1x128xf32> to vector<2x128xf32>
    %93 = arith.addf %90, %92 : vector<2x128xf32>
    %94 = tpu.iota {dimensions = array<i32: 1>} : vector<2x128xi32>
    %c1_i32 = arith.constant 1 : i32
    %95 = vector.broadcast %c1_i32 : i32 to vector<2x128xi32>
    %96 = arith.cmpi sge, %94, %95 : vector<2x128xi32>
    %c9_i32 = arith.constant 9 : i32
    %97 = vector.broadcast %c9_i32 : i32 to vector<2x128xi32>
    %98 = arith.cmpi slt, %94, %97 : vector<2x128xi32>
    %99 = arith.andi %96, %98 : vector<2x128xi1>
    %cst_60 = arith.constant 0.000000e+00 : f32
    %100 = vector.broadcast %cst_60 : f32 to vector<2x128xf32>
    %c1_i32_61 = arith.constant 1 : i32
    %101 = vector.broadcast %c1_i32_61 : i32 to vector<2x128xi32>
    %102 = arith.cmpi sge, %94, %101 : vector<2x128xi32>
    %c6_i32 = arith.constant 6 : i32
    %103 = vector.broadcast %c6_i32 : i32 to vector<2x128xi32>
    %104 = arith.cmpi slt, %94, %103 : vector<2x128xi32>
    %105 = arith.andi %102, %104 : vector<2x128xi1>
    %cst_62 = arith.constant 0xFF800000 : f32
    %106 = vector.broadcast %cst_62 : f32 to vector<2x128xf32>
    %107 = arith.select %105, %93, %106 : vector<2x128xi1>, vector<2x128xf32>
    %cst_63 = arith.constant dense<0xFF800000> : vector<2xf32>
    %108 = vector.multi_reduction <maximumf>, %107, %cst_63 [1] : vector<2x128xf32> to vector<2xf32>
    %109 = vector.shape_cast %108 : vector<2xf32> to vector<2x1xf32>
    %cst_64 = arith.constant 0.000000e+00 : f32
    %110 = vector.shape_cast %109 : vector<2x1xf32> to vector<2x1xf32>
    %111 = vector.broadcast %110 : vector<2x1xf32> to vector<2x128xf32>
    %112 = vector.broadcast %cst_64 : f32 to vector<2x128xf32>
    %113 = arith.select %105, %111, %112 : vector<2x128xi1>, vector<2x128xf32>
    %114 = arith.addf %100, %113 : vector<2x128xf32>
    %c6_i32_65 = arith.constant 6 : i32
    %115 = vector.broadcast %c6_i32_65 : i32 to vector<2x128xi32>
    %116 = arith.cmpi sge, %94, %115 : vector<2x128xi32>
    %c9_i32_66 = arith.constant 9 : i32
    %117 = vector.broadcast %c9_i32_66 : i32 to vector<2x128xi32>
    %118 = arith.cmpi slt, %94, %117 : vector<2x128xi32>
    %119 = arith.andi %116, %118 : vector<2x128xi1>
    %cst_67 = arith.constant 0xFF800000 : f32
    %120 = vector.broadcast %cst_67 : f32 to vector<2x128xf32>
    %121 = arith.select %119, %93, %120 : vector<2x128xi1>, vector<2x128xf32>
    %cst_68 = arith.constant dense<0xFF800000> : vector<2xf32>
    %122 = vector.multi_reduction <maximumf>, %121, %cst_68 [1] : vector<2x128xf32> to vector<2xf32>
    %123 = vector.shape_cast %122 : vector<2xf32> to vector<2x1xf32>
    %cst_69 = arith.constant 0.000000e+00 : f32
    %124 = vector.shape_cast %123 : vector<2x1xf32> to vector<2x1xf32>
    %125 = vector.broadcast %124 : vector<2x1xf32> to vector<2x128xf32>
    %126 = vector.broadcast %cst_69 : f32 to vector<2x128xf32>
    %127 = arith.select %119, %125, %126 : vector<2x128xi1>, vector<2x128xf32>
    %128 = arith.addf %114, %127 : vector<2x128xf32>
    %129 = arith.subf %93, %128 : vector<2x128xf32>
    %130 = math.exp %129 : vector<2x128xf32>
    %cst_70 = arith.constant 0.000000e+00 : f32
    %131 = vector.broadcast %cst_70 : f32 to vector<2x128xf32>
    %132 = arith.select %99, %130, %131 : vector<2x128xi1>, vector<2x128xf32>
    %c0_71 = arith.constant 0 : index
    %c0_72 = arith.constant 0 : index
    %133 = vector.load %arg18[%c0_71, %c0_72] : memref<128x128xf32, #tpu.memory_space<vmem>>, vector<128x128xf32>
    %cst_73 = arith.constant dense<0.000000e+00> : vector<2x128xf32>
    %134 = tpu.matmul %132, %133, %cst_73 {dimension_numbers = #tpu.dot_dimension_numbers<[1], [0], [0], [1], [0, 0, 1, 1], [], []>} : vector<2x128xf32>, vector<128x128xf32>, vector<2x128xf32> -> vector<2x128xf32>
    %cst_74 = arith.constant 1.000000e+00 : f32
    %135 = vector.broadcast %cst_74 : f32 to vector<2x128xf32>
    %136 = arith.select %99, %134, %135 : vector<2x128xi1>, vector<2x128xf32>
    %137 = tpu.reciprocal %136 : vector<2x128xf32> -> vector<2x128xf32>
    %138 = arith.mulf %132, %137 : vector<2x128xf32>
    %cst_75 = arith.constant 5.000000e-01 : f32
    %139 = vector.broadcast %cst_75 : f32 to vector<2x128xf32>
    %140 = arith.mulf %139, %93 : vector<2x128xf32>
    %141 = math.tanh %140 : vector<2x128xf32>
    %cst_76 = arith.constant 1.000000e+00 : f32
    %142 = vector.broadcast %cst_76 : f32 to vector<2x128xf32>
    %143 = arith.addf %141, %142 : vector<2x128xf32>
    %cst_77 = arith.constant 5.000000e-01 : f32
    %144 = vector.broadcast %cst_77 : f32 to vector<2x128xf32>
    %145 = arith.mulf %144, %143 : vector<2x128xf32>
    %c0_i32 = arith.constant 0 : i32
    %146 = vector.broadcast %c0_i32 : i32 to vector<2x128xi32>
    %147 = arith.cmpi eq, %94, %146 : vector<2x128xi32>
    %148 = arith.select %147, %145, %138 : vector<2x128xi1>, vector<2x128xf32>
    %c0_78 = arith.constant 0 : index
    %c0_79 = arith.constant 0 : index
    %149 = vector.load %arg19[%c0_78, %c0_79] : memref<2x128xf32, #tpu.memory_space<vmem>>, vector<2x128xf32>
    tpu.vector_store %arg19[%c0_78, %c0_79], %148 {strides = array<i32>} : memref<2x128xf32, #tpu.memory_space<vmem>>, vector<2x128xf32>,
    return
  }
  func.func @transform_0(%arg0: i32) -> (i32, i32) {
    %c0_i32 = arith.constant 0 : i32
    %c0_i32_0 = arith.constant 0 : i32
    %c0_i32_1 = arith.constant 0 : i32
    return %c0_i32, %c0_i32_0 : i32, i32
  }
  func.func @transform_1(%arg0: i32) -> (i32, i32) {
    %c0_i32 = arith.constant 0 : i32
    %c0_i32_0 = arith.constant 0 : i32
    %c0_i32_1 = arith.constant 0 : i32
    return %c0_i32, %c0_i32_0 : i32, i32
  }
  func.func @transform_2(%arg0: i32) -> (i32, i32) {
    %c0_i32 = arith.constant 0 : i32
    %c0_i32_0 = arith.constant 0 : i32
    %c0_i32_1 = arith.constant 0 : i32
    return %c0_i32, %c0_i32_0 : i32, i32
  }
  func.func @transform_3(%arg0: i32) -> (i32, i32) {
    %c0_i32 = arith.constant 0 : i32
    %c0_i32_0 = arith.constant 0 : i32
    %c0_i32_1 = arith.constant 0 : i32
    return %c0_i32, %c0_i32_0 : i32, i32
  }
  func.func @transform_4(%arg0: i32) -> (i32, i32) {
    %c0_i32 = arith.constant 0 : i32
    %c0_i32_0 = arith.constant 0 : i32
    %c0_i32_1 = arith.constant 0 : i32
    return %c0_i32, %c0_i32_0 : i32, i32
  }
  func.func @transform_5(%arg0: i32) -> (i32, i32) {
    %c0_i32 = arith.constant 0 : i32
    %c0_i32_0 = arith.constant 0 : i32
    %c0_i32_1 = arith.constant 0 : i32
    return %c0_i32, %c0_i32_0 : i32, i32
  }
  func.func @transform_6(%arg0: i32) -> (i32, i32) {
    %c0_i32 = arith.constant 0 : i32
    %c0_i32_0 = arith.constant 0 : i32
    %c0_i32_1 = arith.constant 0 : i32
    return %c0_i32, %c0_i32_0 : i32, i32
  }
  func.func @transform_7(%arg0: i32) -> (i32, i32) {
    %c0_i32 = arith.constant 0 : i32
    %c0_i32_0 = arith.constant 0 : i32
    %c0_i32_1 = arith.constant 0 : i32
    return %c0_i32, %c0_i32_0 : i32, i32
  }
  func.func @transform_8(%arg0: i32) -> (i32, i32) {
    %c0_i32 = arith.constant 0 : i32
    %c0_i32_0 = arith.constant 0 : i32
    %c0_i32_1 = arith.constant 0 : i32
    return %c0_i32, %c0_i32_0 : i32, i32
  }
  func.func @transform_9(%arg0: i32) -> (i32, i32) {
    %c0_i32 = arith.constant 0 : i32
    %c0_i32_0 = arith.constant 0 : i32
    %c0_i32_1 = arith.constant 0 : i32
    return %c0_i32, %c0_i32_0 : i32, i32
  }
  func.func @transform_10(%arg0: i32) -> (i32, i32) {
    %c0_i32 = arith.constant 0 : i32
    %c0_i32_0 = arith.constant 0 : i32
    %c0_i32_1 = arith.constant 0 : i32
    return %c0_i32, %c0_i32_0 : i32, i32
  }
  func.func @transform_11(%arg0: i32) -> (i32, i32) {
    %c0_i32 = arith.constant 0 : i32
    %c0_i32_0 = arith.constant 0 : i32
    %c0_i32_1 = arith.constant 0 : i32
    return %c0_i32, %c0_i32_0 : i32, i32
  }
  func.func @transform_12(%arg0: i32) -> (i32, i32) {
    %c0_i32 = arith.constant 0 : i32
    %c0_i32_0 = arith.constant 0 : i32
    %c0_i32_1 = arith.constant 0 : i32
    return %c0_i32, %c0_i32_0 : i32, i32
  }
  func.func @transform_13(%arg0: i32) -> (i32, i32) {
    %c0_i32 = arith.constant 0 : i32
    %c0_i32_0 = arith.constant 0 : i32
    %c0_i32_1 = arith.constant 0 : i32
    return %c0_i32, %c0_i32_0 : i32, i32
  }
  func.func @transform_14(%arg0: i32) -> (i32, i32) {
    %c0_i32 = arith.constant 0 : i32
    %c0_i32_0 = arith.constant 0 : i32
    %c0_i32_1 = arith.constant 0 : i32
    return %c0_i32, %c0_i32_0 : i32, i32
  }
  func.func @transform_15(%arg0: i32) -> (i32, i32) {
    %c0_i32 = arith.constant 0 : i32
    %c0_i32_0 = arith.constant 0 : i32
    %c0_i32_1 = arith.constant 0 : i32
    return %c0_i32, %c0_i32_0 : i32, i32
  }
  func.func @transform_16(%arg0: i32) -> (i32, i32) {
    %c0_i32 = arith.constant 0 : i32
    %c0_i32_0 = arith.constant 0 : i32
    %c0_i32_1 = arith.constant 0 : i32
    return %c0_i32, %c0_i32_0 : i32, i32
  }
  func.func @transform_17(%arg0: i32) -> (i32, i32) {
    %c0_i32 = arith.constant 0 : i32
    %c0_i32_0 = arith.constant 0 : i32
    %c0_i32_1 = arith.constant 0 : i32
    return %c0_i32, %c0_i32_0 : i32, i32
  }
  func.func @transform_18(%arg0: i32) -> (i32, i32) {
    %c0_i32 = arith.constant 0 : i32
    %c0_i32_0 = arith.constant 0 : i32
    %c0_i32_1 = arith.constant 0 : i32
    return %c0_i32, %c0_i32_0 : i32, i32
  }
}

</mosaic_0001>

<llo_original>
// kernel: tpu_custom_call.1
$region0: #{tpu_custom_call.1}
  #allocation0 [shape = 'u32[]', space=smem, size = 0x4, offset = 0x4, fixed_abs, tag = 'smem constant byte address 0x4 - core index']
  #allocation1 [shape = 'u32[144,128]{1,0:T(1,128)}', space=vmem, size = 0x12000, scoped, tag = 'internal scratch']
  %s0 = inlined_call_operand.hbm [shape: f32[2,64], index: 0, kind: input, shape index: {}]
  %s1 = inlined_call_operand.vmem [shape: bf16[64,64], index: 1, kind: input, shape index: {}]
  %s2 = inlined_call_operand.hbm [shape: f32[1,64], index: 2, kind: input, shape index: {}]
  %s3 = inlined_call_operand.vmem [shape: bf16[64,64], index: 3, kind: input, shape index: {}]
  %s4 = inlined_call_operand.hbm [shape: f32[1,64], index: 4, kind: input, shape index: {}]
  %s5 = inlined_call_operand.hbm [shape: f32[1,16], index: 5, kind: input, shape index: {}]
  %s6 = inlined_call_operand.hbm [shape: f32[1,64], index: 6, kind: input, shape index: {}]
  %s7 = inlined_call_operand.vmem [shape: f32[64,16], index: 7, kind: input, shape index: {}]
  %s8 = inlined_call_operand.vmem [shape: f32[16,64], index: 8, kind: input, shape index: {}]
  %s9 = inlined_call_operand.vmem [shape: bf16[64,64], index: 9, kind: input, shape index: {}]
  %s10 = inlined_call_operand.hbm [shape: f32[1,64], index: 10, kind: input, shape index: {}]
  %s11 = inlined_call_operand.hbm [shape: f32[1,32], index: 11, kind: input, shape index: {}]
  %s12 = inlined_call_operand.hbm [shape: f32[1,64], index: 12, kind: input, shape index: {}]
  %s13 = inlined_call_operand.vmem [shape: f32[64,32], index: 13, kind: input, shape index: {}]
  %s14 = inlined_call_operand.hbm [shape: f32[32,64], index: 14, kind: input, shape index: {}]
  %s15 = inlined_call_operand.hbm [shape: bf16[64,128], index: 15, kind: input, shape index: {}]
  %s16 = inlined_call_operand.hbm [shape: f32[1,128], index: 16, kind: input, shape index: {}]
  %s17 = inlined_call_operand.vmem [shape: f32[128,128], index: 17, kind: input, shape index: {}]
  %s18 = inlined_call_operand.hbm [shape: f32[2,128], index: 18, kind: output, shape index: {}]
  %s19 = sld [smem:[#allocation0]]
  $region126: #{tpu_custom_call.1} parent=0
    _
  %s21 = ssub.s32 1, %s19
  %s22 = scalar_select 0, %s21, %s19
  $region1: #{tpu_custom_call.1} parent=0
    #allocation2 [shape = 'u8[1024]{0}', space=vmem, size = 0x400, scoped, tag = 'input window, operand 0, single buffered']
    #allocation3 [shape = 's32[1]{0}', space=sflag, size = 0x4, scoped, tag = 'scoped memory for tpu_custom_call.1']
    #allocation4 [shape = 's32[1]{0}', space=sflag, size = 0x4, scoped, tag = 'scoped memory for tpu_custom_call.1']
    #allocation5 [shape = 'u8[512]{0}', space=vmem, size = 0x400, scoped, tag = 'input window, operand 2, single buffered']
    #allocation6 [shape = 's32[1]{0}', space=sflag, size = 0x4, scoped, tag = 'scoped memory for tpu_custom_call.1']
    #allocation7 [shape = 'u8[512]{0}', space=vmem, size = 0x400, scoped, tag = 'input window, operand 4, single buffered']
    #allocation8 [shape = 'u8[512]{0}', space=vmem, size = 0x400, scoped, tag = 'input window, operand 5, single buffered']
    #allocation9 [shape = 's32[1]{0}', space=sflag, size = 0x4, scoped, tag = 'scoped memory for tpu_custom_call.1']
    #allocation10 [shape = 'u8[512]{0}', space=vmem, size = 0x400, scoped, tag = 'input window, operand 6, single buffered']
    #allocation11 [shape = 'u8[512]{0}', space=vmem, size = 0x400, scoped, tag = 'input window, operand 10, single buffered']
    #allocation12 [shape = 's32[1]{0}', space=sflag, size = 0x4, scoped, tag = 'scoped memory for tpu_custom_call.1']
    #allocation13 [shape = 'u8[512]{0}', space=vmem, size = 0x400, scoped, tag = 'input window, operand 11, single buffered']
    #allocation14 [shape = 'u8[512]{0}', space=vmem, size = 0x400, scoped, tag = 'input window, operand 12, single buffered']
    #allocation15 [shape = 's32[1]{0}', space=sflag, size = 0x4, scoped, tag = 'scoped memory for tpu_custom_call.1']
    #allocation16 [shape = 'u8[16384]{0}', space=vmem, size = 0x4000, scoped, tag = 'input window, operand 14, single buffered']
    #allocation17 [shape = 'u8[16384]{0}', space=vmem, size = 0x4000, scoped, tag = 'input window, operand 15, single buffered']
    #allocation18 [shape = 's32[1]{0}', space=sflag, size = 0x4, scoped, tag = 'scoped memory for tpu_custom_call.1']
    #allocation19 [shape = 'u8[512]{0}', space=vmem, size = 0x400, scoped, tag = 'input window, operand 16, single buffered']
    #allocation20 [shape = 'u8[1024]{0}', space=vmem, size = 0x400, scoped, tag = 'output window, operand 0, single buffered']
    %23 = vsyncpa [#allocation3], 0
    %24 = vsyncpa [#allocation6], 0
    %25 = vsyncpa [#allocation9], 0
    %26 = vsyncpa [#allocation12], 0
    %27 = vsyncpa [#allocation15], 0
    %28 = vsyncpa [#allocation18], 0
    %29 = vsyncpa [#allocation4], 0
    // Predicated region
    $region2: #{tpu_custom_call.1} parent=1 // pred_check
      _
    $region3: #{tpu_custom_call.1} parent=1 // pred_check_branch
      %31 = sbr.rel (0) target = $region5
    $region4: #{tpu_custom_call.1} parent=1 // pred_region
      %s33 = ssub.s32 32, 32
      %34 = vsyncadd [#allocation3], %s33
      %s36 = sshll.u32 [#allocation2], 4
      %s37 = int_to_ptr.vmem [resolvable:$true] %s36
      %39 = dma.hbm_to_vmem [thread:$0]  %s0, 32, %s37, [#allocation3]
    $region5: #{tpu_custom_call.1} parent=1 // pred_fallthru
      _
    // Predicated region
    $region6: #{tpu_custom_call.1} parent=1 // pred_check
      _
    $region7: #{tpu_custom_call.1} parent=1 // pred_check_branch
      %41 = sbr.rel (0) target = $region9
    $region8: #{tpu_custom_call.1} parent=1 // pred_region
      _
    $region9: #{tpu_custom_call.1} parent=1 // pred_fallthru
      _
    // Predicated region
    $region10: #{tpu_custom_call.1} parent=1 // pred_check
      _
    $region11: #{tpu_custom_call.1} parent=1 // pred_check_branch
      %43 = sbr.rel (0) target = $region13
    $region12: #{tpu_custom_call.1} parent=1 // pred_region
      %s45 = ssub.s32 16, 16
      %46 = vsyncadd [#allocation6], %s45
      %s48 = sshll.u32 [#allocation5], 4
      %s49 = int_to_ptr.vmem [resolvable:$true] %s48
      %51 = dma.hbm_to_vmem [thread:$0]  %s2, 16, %s49, [#allocation6]
    $region13: #{tpu_custom_call.1} parent=1 // pred_fallthru
      _
    // Predicated region
    $region14: #{tpu_custom_call.1} parent=1 // pred_check
      _
    $region15: #{tpu_custom_call.1} parent=1 // pred_check_branch
      %53 = sbr.rel (0) target = $region17
    $region16: #{tpu_custom_call.1} parent=1 // pred_region
      _
    $region17: #{tpu_custom_call.1} parent=1 // pred_fallthru
      _
    // Predicated region
    $region18: #{tpu_custom_call.1} parent=1 // pred_check
      _
    $region19: #{tpu_custom_call.1} parent=1 // pred_check_branch
      %55 = sbr.rel (0) target = $region21
    $region20: #{tpu_custom_call.1} parent=1 // pred_region
      %s57 = ssub.s32 16, 16
      %58 = vsyncadd [#allocation6], %s57
      %s60 = sshll.u32 [#allocation7], 4
      %s61 = int_to_ptr.vmem [resolvable:$true] %s60
      %63 = dma.hbm_to_vmem [thread:$0]  %s4, 16, %s61, [#allocation6]
    $region21: #{tpu_custom_call.1} parent=1 // pred_fallthru
      _
    // Predicated region
    $region22: #{tpu_custom_call.1} parent=1 // pred_check
      _
    $region23: #{tpu_custom_call.1} parent=1 // pred_check_branch
      %65 = sbr.rel (0) target = $region25
    $region24: #{tpu_custom_call.1} parent=1 // pred_region
      %s67 = ssub.s32 16, 16
      %68 = vsyncadd [#allocation9], %s67
      %s70 = sshll.u32 [#allocation8], 4
      %s71 = int_to_ptr.vmem [resolvable:$true] %s70
      %73 = dma.hbm_to_vmem [thread:$0]  %s5, 16, %s71, [#allocation9]
    $region25: #{tpu_custom_call.1} parent=1 // pred_fallthru
      _
    // Predicated region
    $region26: #{tpu_custom_call.1} parent=1 // pred_check
      _
    $region27: #{tpu_custom_call.1} parent=1 // pred_check_branch
      %75 = sbr.rel (0) target = $region29
    $region28: #{tpu_custom_call.1} parent=1 // pred_region
      %s77 = ssub.s32 16, 16
      %78 = vsyncadd [#allocation9], %s77
      %s80 = sshll.u32 [#allocation10], 4
      %s81 = int_to_ptr.vmem [resolvable:$true] %s80
      %83 = dma.hbm_to_vmem [thread:$0]  %s6, 16, %s81, [#allocation9]
    $region29: #{tpu_custom_call.1} parent=1 // pred_fallthru
      _
    // Predicated region
    $region30: #{tpu_custom_call.1} parent=1 // pred_check
      _
    $region31: #{tpu_custom_call.1} parent=1 // pred_check_branch
      %85 = sbr.rel (0) target = $region33
    $region32: #{tpu_custom_call.1} parent=1 // pred_region
      _
    $region33: #{tpu_custom_call.1} parent=1 // pred_fallthru
      _
    // Predicated region
    $region34: #{tpu_custom_call.1} parent=1 // pred_check
      _
    $region35: #{tpu_custom_call.1} parent=1 // pred_check_branch
      %87 = sbr.rel (0) target = $region37
    $region36: #{tpu_custom_call.1} parent=1 // pred_region
      _
    $region37: #{tpu_custom_call.1} parent=1 // pred_fallthru
      _
    // Predicated region
    $region38: #{tpu_custom_call.1} parent=1 // pred_check
      _
    $region39: #{tpu_custom_call.1} parent=1 // pred_check_branch
      %89 = sbr.rel (0) target = $region41
    $region40: #{tpu_custom_call.1} parent=1 // pred_region
      _
    $region41: #{tpu_custom_call.1} parent=1 // pred_fallthru
      _
    // Predicated region
    $region42: #{tpu_custom_call.1} parent=1 // pred_check
      _
    $region43: #{tpu_custom_call.1} parent=1 // pred_check_branch
      %91 = sbr.rel (0) target = $region45
    $region44: #{tpu_custom_call.1} parent=1 // pred_region
      %s93 = ssub.s32 16, 16
      %94 = vsyncadd [#allocation12], %s93
      %s96 = sshll.u32 [#allocation11], 4
      %s97 = int_to_ptr.vmem [resolvable:$true] %s96
      %99 = dma.hbm_to_vmem [thread:$0]  %s10, 16, %s97, [#allocation12]
    $region45: #{tpu_custom_call.1} parent=1 // pred_fallthru
      _
    // Predicated region
    $region46: #{tpu_custom_call.1} parent=1 // pred_check
      _
    $region47: #{tpu_custom_call.1} parent=1 // pred_check_branch
      %101 = sbr.rel (0) target = $region49
    $region48: #{tpu_custom_call.1} parent=1 // pred_region
      %s103 = ssub.s32 16, 16
      %104 = vsyncadd [#allocation12], %s103
      %s106 = sshll.u32 [#allocation13], 4
      %s107 = int_to_ptr.vmem [resolvable:$true] %s106
      %109 = dma.hbm_to_vmem [thread:$0]  %s11, 16, %s107, [#allocation12]
    $region49: #{tpu_custom_call.1} parent=1 // pred_fallthru
      _
    // Predicated region
    $region50: #{tpu_custom_call.1} parent=1 // pred_check
      _
    $region51: #{tpu_custom_call.1} parent=1 // pred_check_branch
      %111 = sbr.rel (0) target = $region53
    $region52: #{tpu_custom_call.1} parent=1 // pred_region
      %s113 = ssub.s32 16, 16
      %114 = vsyncadd [#allocation15], %s113
      %s116 = sshll.u32 [#allocation14], 4
      %s117 = int_to_ptr.vmem [resolvable:$true] %s116
      %119 = dma.hbm_to_vmem [thread:$0]  %s12, 16, %s117, [#allocation15]
    $region53: #{tpu_custom_call.1} parent=1 // pred_fallthru
      _
    // Predicated region
    $region54: #{tpu_custom_call.1} parent=1 // pred_check
      _
    $region55: #{tpu_custom_call.1} parent=1 // pred_check_branch
      %121 = sbr.rel (0) target = $region57
    $region56: #{tpu_custom_call.1} parent=1 // pred_region
      _
    $region57: #{tpu_custom_call.1} parent=1 // pred_fallthru
      _
    // Predicated region
    $region58: #{tpu_custom_call.1} parent=1 // pred_check
      _
    $region59: #{tpu_custom_call.1} parent=1 // pred_check_branch
      %123 = sbr.rel (0) target = $region61
    $region60: #{tpu_custom_call.1} parent=1 // pred_region
      %s125 = ssub.s32 512, 512
      %126 = vsyncadd [#allocation15], %s125
      %s127 = sshll.u32 [#allocation16], 4
      %s128 = int_to_ptr.vmem [resolvable:$true] %s127
      %133 = dma.hbm_to_vmem [thread:$0]  %s14, 512, %s128, [#allocation15], 128, 128, 8
    $region61: #{tpu_custom_call.1} parent=1 // pred_fallthru
      _
    // Predicated region
    $region62: #{tpu_custom_call.1} parent=1 // pred_check
      _
    $region63: #{tpu_custom_call.1} parent=1 // pred_check_branch
      %135 = sbr.rel (0) target = $region65
    $region64: #{tpu_custom_call.1} parent=1 // pred_region
      %s137 = ssub.s32 512, 512
      %138 = vsyncadd [#allocation18], %s137
      %s139 = sshll.u32 [#allocation17], 4
      %s140 = int_to_ptr.vmem [resolvable:$true] %s139
      %145 = dma.hbm_to_vmem [thread:$0]  %s15, 512, %s140, [#allocation18], 64, 64, 4
    $region65: #{tpu_custom_call.1} parent=1 // pred_fallthru
      _
    // Predicated region
    $region66: #{tpu_custom_call.1} parent=1 // pred_check
      _
    $region67: #{tpu_custom_call.1} parent=1 // pred_check_branch
      %147 = sbr.rel (0) target = $region69
    $region68: #{tpu_custom_call.1} parent=1 // pred_region
      %s149 = ssub.s32 16, 16
      %150 = vsyncadd [#allocation18], %s149
      %s152 = sshll.u32 [#allocation19], 4
      %s153 = int_to_ptr.vmem [resolvable:$true] %s152
      %155 = dma.hbm_to_vmem [thread:$0]  %s16, 16, %s153, [#allocation18]
    $region69: #{tpu_custom_call.1} parent=1 // pred_fallthru
      _
    // Predicated region
    $region70: #{tpu_custom_call.1} parent=1 // pred_check
      _
    $region71: #{tpu_custom_call.1} parent=1 // pred_check_branch
      %157 = sbr.rel (0) target = $region73
    $region72: #{tpu_custom_call.1} parent=1 // pred_region
      _
    $region73: #{tpu_custom_call.1} parent=1 // pred_fallthru
      _
    // Predicated region
    $region74: #{tpu_custom_call.1} parent=1 // pred_check
      _
    $region75: #{tpu_custom_call.1} parent=1 // pred_check_branch
      %159 = sbr.rel (0) target = $region77
    $region76: #{tpu_custom_call.1} parent=1 // pred_region
      %160 = dma.done [#allocation3], 32
    $region77: #{tpu_custom_call.1} parent=1 // pred_fallthru
      _
    // Predicated region
    $region78: #{tpu_custom_call.1} parent=1 // pred_check
      _
    $region79: #{tpu_custom_call.1} parent=1 // pred_check_branch
      %162 = sbr.rel (0) target = $region81
    $region80: #{tpu_custom_call.1} parent=1 // pred_region
      %163 = dma.done [#allocation6], 16
    $region81: #{tpu_custom_call.1} parent=1 // pred_fallthru
      _
    // Predicated region
    $region82: #{tpu_custom_call.1} parent=1 // pred_check
      _
    $region83: #{tpu_custom_call.1} parent=1 // pred_check_branch
      %165 = sbr.rel (0) target = $region85
    $region84: #{tpu_custom_call.1} parent=1 // pred_region
      %166 = dma.done [#allocation6], 16
    $region85: #{tpu_custom_call.1} parent=1 // pred_fallthru
      _
    // Predicated region
    $region86: #{tpu_custom_call.1} parent=1 // pred_check
      _
    $region87: #{tpu_custom_call.1} parent=1 // pred_check_branch
      %168 = sbr.rel (0) target = $region89
    $region88: #{tpu_custom_call.1} parent=1 // pred_region
      %169 = dma.done [#allocation9], 16
    $region89: #{tpu_custom_call.1} parent=1 // pred_fallthru
      _
    // Predicated region
    $region90: #{tpu_custom_call.1} parent=1 // pred_check
      _
    $region91: #{tpu_custom_call.1} parent=1 // pred_check_branch
      %171 = sbr.rel (0) target = $region93
    $region92: #{tpu_custom_call.1} parent=1 // pred_region
      %172 = dma.done [#allocation9], 16
    $region93: #{tpu_custom_call.1} parent=1 // pred_fallthru
      _
    // Predicated region
    $region94: #{tpu_custom_call.1} parent=1 // pred_check
      _
    $region95: #{tpu_custom_call.1} parent=1 // pred_check_branch
      %174 = sbr.rel (0) target = $region97
    $region96: #{tpu_custom_call.1} parent=1 // pred_region
      %175 = dma.done [#allocation12], 16
    $region97: #{tpu_custom_call.1} parent=1 // pred_fallthru
      _
    // Predicated region
    $region98: #{tpu_custom_call.1} parent=1 // pred_check
      _
    $region99: #{tpu_custom_call.1} parent=1 // pred_check_branch
      %177 = sbr.rel (0) target = $region101
    $region100: #{tpu_custom_call.1} parent=1 // pred_region
      %178 = dma.done [#allocation12], 16
    $region101: #{tpu_custom_call.1} parent=1 // pred_fallthru
      _
    // Predicated region
    $region102: #{tpu_custom_call.1} parent=1 // pred_check
      _
    $region103: #{tpu_custom_call.1} parent=1 // pred_check_branch
      %180 = sbr.rel (0) target = $region105
    $region104: #{tpu_custom_call.1} parent=1 // pred_region
      %181 = dma.done [#allocation15], 16
    $region105: #{tpu_custom_call.1} parent=1 // pred_fallthru
      _
    // Predicated region
    $region106: #{tpu_custom_call.1} parent=1 // pred_check
      _
    $region107: #{tpu_custom_call.1} parent=1 // pred_check_branch
      %183 = sbr.rel (0) target = $region109
    $region108: #{tpu_custom_call.1} parent=1 // pred_region
      %184 = dma.done [#allocation15], 512
    $region109: #{tpu_custom_call.1} parent=1 // pred_fallthru
      _
    // Predicated region
    $region110: #{tpu_custom_call.1} parent=1 // pred_check
      _
    $region111: #{tpu_custom_call.1} parent=1 // pred_check_branch
      %186 = sbr.rel (0) target = $region113
    $region112: #{tpu_custom_call.1} parent=1 // pred_region
      %187 = dma.done [#allocation18], 512
    $region113: #{tpu_custom_call.1} parent=1 // pred_fallthru
      _
    // Predicated region
    $region114: #{tpu_custom_call.1} parent=1 // pred_check
      _
    $region115: #{tpu_custom_call.1} parent=1 // pred_check_branch
      %189 = sbr.rel (0) target = $region117
    $region116: #{tpu_custom_call.1} parent=1 // pred_region
      %190 = dma.done [#allocation18], 16
    $region117: #{tpu_custom_call.1} parent=1 // pred_fallthru
      _
    %v192 = vld [vmem:[#allocation2] sm:$0x3]
    %v193 = vpack.c.bf16 %v192, %v192
    %v194 = vld [vmem:[%s1] sm:$0xf]
    %v195 = vld [vmem:[%s1 + $0x4] sm:$0xf]
    %v196 = vld [vmem:[%s1 + $0x8] sm:$0xf]
    %v197 = vld [vmem:[%s1 + $0xc] sm:$0xf]
    %v198 = vld [vmem:[%s1 + $0x10] sm:$0xf]
    %v199 = vld [vmem:[%s1 + $0x14] sm:$0xf]
    %v200 = vld [vmem:[%s1 + $0x18] sm:$0xf]
    %v201 = vld [vmem:[%s1 + $0x1c] sm:$0xf]
    %v202 = vld [vmem:[#allocation5] sm:$0x1]
    %v204 = vlaneseq
    %v205 = vshrl.u32 %v204, 7
    %v206 = vsub.s32 0, %v205
    %v207 = vrot.slane %v202, %v206
    %v217 = vunpack.c.l.b16 %v194
    %v218 = vunpack.c.l.b16 %v195
    %v219 = vunpack.c.l.b16 %v196
    %v220 = vunpack.c.l.b16 %v197
    %v221 = vunpack.c.l.b16 %v198
    %v222 = vunpack.c.l.b16 %v199
    %v223 = vunpack.c.l.b16 %v200
    %v224 = vunpack.c.l.b16 %v201
    %v225 = vpack.c.b16 %v218, %v217
    %v226 = vpack.c.b16 %v220, %v219
    %v227 = vpack.c.b16 %v222, %v221
    %v228 = vpack.c.b16 %v224, %v223
    %vm233 = vcmask 523264
    %v235 = vsel %vm233, %v193, 0
    %237 = vmatprep.subr.bf16.mxu0 0
    %238 = vmatpush1.bf16.msra.mxu0 %v225
    %239 = vmatprep.subr.bf16.mxu0 0
    %240 = vmatpush1.bf16.msra.mxu0 %v226
    %241 = vmatprep.subr.bf16.mxu0 0
    %242 = vmatpush1.bf16.msra.mxu0 %v227
    %243 = vmatprep.subr.bf16.mxu0 0
    %244 = vmatpush1.bf16.msra.mxu0 %v228
    %245 = vmatprep.subr.bf16.mxu0 0
    %246 = vmatpush1.bf16.msra.mxu0 0
    %247 = vmatprep.subr.bf16.mxu0 0
    %248 = vmatpush1.bf16.msra.mxu0 0
    %249 = vmatprep.subr.bf16.mxu0 0
    %250 = vmatpush1.bf16.msra.mxu0 0
    %251 = vmatprep.subr.bf16.mxu0 0
    %252 = vmatpush1.bf16.msra.mxu0 0
    %253 = vmatprep.subr.bf16.mxu0 0
    %254 = vmatpush1.bf16.msra.mxu0 0
    %255 = vmatprep.subr.bf16.mxu0 0
    %256 = vmatpush1.bf16.msra.mxu0 0
    %257 = vmatprep.subr.bf16.mxu0 0
    %258 = vmatpush1.bf16.msra.mxu0 0
    %259 = vmatprep.subr.bf16.mxu0 0
    %260 = vmatpush1.bf16.msra.mxu0 0
    %261 = vmatprep.subr.bf16.mxu0 0
    %262 = vmatpush1.bf16.msra.mxu0 0
    %263 = vmatprep.subr.bf16.mxu0 0
    %264 = vmatpush1.bf16.msra.mxu0 0
    %265 = vmatprep.subr.bf16.mxu0 0
    %266 = vmatpush1.bf16.msra.mxu0 0
    %267 = vmatprep.subr.bf16.mxu0 0
    %268 = vmatpush1.bf16.msra.mxu0 0
    %269 = vmatprep.mubr.bf16.mxu0 0
    %270 = vmatmul.mubr.bf16.gmra.mrb[0].mxu0 %v235
    %v271 = vpop.f32.mrb[0].mxu0
    %v272 = vadd.f32 %v207, %v271
    %v273 = vpop.f32.mrb[0].mxu0
    %v274 = vpop.f32.mrb[0].mxu0
    %v275 = vpop.f32.mrb[0].mxu0
    %276 = vdwg.mxu0
    %vm277 = vcmp.ge.f32.partialorder %v272, 0.0
    %v278 = vmul.f32 %v272, 0.2
    %v279 = vsel %vm277, %v272, %v278
    %v280 = vpack.c.bf16 %v279, %v279
    %v281 = vld [vmem:[%s3] sm:$0xf]
    %v282 = vld [vmem:[%s3 + $0x4] sm:$0xf]
    %v283 = vld [vmem:[%s3 + $0x8] sm:$0xf]
    %v284 = vld [vmem:[%s3 + $0xc] sm:$0xf]
    %v285 = vld [vmem:[%s3 + $0x10] sm:$0xf]
    %v286 = vld [vmem:[%s3 + $0x14] sm:$0xf]
    %v287 = vld [vmem:[%s3 + $0x18] sm:$0xf]
    %v288 = vld [vmem:[%s3 + $0x1c] sm:$0xf]
    %v289 = vld [vmem:[#allocation7] sm:$0x1]
    %v291 = vlaneseq
    %v292 = vshrl.u32 %v291, 7
    %v293 = vsub.s32 0, %v292
    %v294 = vrot.slane %v289, %v293
    %v304 = vunpack.c.l.b16 %v281
    %v305 = vunpack.c.l.b16 %v282
    %v306 = vunpack.c.l.b16 %v283
    %v307 = vunpack.c.l.b16 %v284
    %v308 = vunpack.c.l.b16 %v285
    %v309 = vunpack.c.l.b16 %v286
    %v310 = vunpack.c.l.b16 %v287
    %v311 = vunpack.c.l.b16 %v288
    %v312 = vpack.c.b16 %v305, %v304
    %v313 = vpack.c.b16 %v307, %v306
    %v314 = vpack.c.b16 %v309, %v308
    %v315 = vpack.c.b16 %v311, %v310
    %v321 = vsel %vm233, %v280, 0
    %323 = vmatprep.subr.bf16.mxu0 0
    %324 = vmatpush1.bf16.msra.mxu0 %v312
    %325 = vmatprep.subr.bf16.mxu0 0
    %326 = vmatpush1.bf16.msra.mxu0 %v313
    %327 = vmatprep.subr.bf16.mxu0 0
    %328 = vmatpush1.bf16.msra.mxu0 %v314
    %329 = vmatprep.subr.bf16.mxu0 0
    %330 = vmatpush1.bf16.msra.mxu0 %v315
    %331 = vmatprep.subr.bf16.mxu0 0
    %332 = vmatpush1.bf16.msra.mxu0 0
    %333 = vmatprep.subr.bf16.mxu0 0
    %334 = vmatpush1.bf16.msra.mxu0 0
    %335 = vmatprep.subr.bf16.mxu0 0
    %336 = vmatpush1.bf16.msra.mxu0 0
    %337 = vmatprep.subr.bf16.mxu0 0
    %338 = vmatpush1.bf16.msra.mxu0 0
    %339 = vmatprep.subr.bf16.mxu0 0
    %340 = vmatpush1.bf16.msra.mxu0 0
    %341 = vmatprep.subr.bf16.mxu0 0
    %342 = vmatpush1.bf16.msra.mxu0 0
    %343 = vmatprep.subr.bf16.mxu0 0
    %344 = vmatpush1.bf16.msra.mxu0 0
    %345 = vmatprep.subr.bf16.mxu0 0
    %346 = vmatpush1.bf16.msra.mxu0 0
    %347 = vmatprep.subr.bf16.mxu0 0
    %348 = vmatpush1.bf16.msra.mxu0 0
    %349 = vmatprep.subr.bf16.mxu0 0
    %350 = vmatpush1.bf16.msra.mxu0 0
    %351 = vmatprep.subr.bf16.mxu0 0
    %352 = vmatpush1.bf16.msra.mxu0 0
    %353 = vmatprep.subr.bf16.mxu0 0
    %354 = vmatpush1.bf16.msra.mxu0 0
    %355 = vmatprep.mubr.bf16.mxu0 0
    %356 = vmatmul.mubr.bf16.gmra.mrb[0].mxu0 %v321
    %v357 = vpop.f32.mrb[0].mxu0
    %v358 = vadd.f32 %v294, %v357
    %v359 = vpop.f32.mrb[0].mxu0
    %v360 = vpop.f32.mrb[0].mxu0
    %v361 = vpop.f32.mrb[0].mxu0
    %362 = vdwg.mxu0
    %v363 = vld [vmem:[#allocation8] sm:$0x1]
    %v364 = vld [vmem:[#allocation10] sm:$0x1]
    %v365 = vld [vmem:[%s7] sm:$0xff]
    %v366 = vld [vmem:[%s7 + $0x8] sm:$0xff]
    %v367 = vld [vmem:[%s7 + $0x10] sm:$0xff]
    %v368 = vld [vmem:[%s7 + $0x18] sm:$0xff]
    %v369 = vld [vmem:[%s7 + $0x20] sm:$0xff]
    %v370 = vld [vmem:[%s7 + $0x28] sm:$0xff]
    %v371 = vld [vmem:[%s7 + $0x30] sm:$0xff]
    %v372 = vld [vmem:[%s7 + $0x38] sm:$0xff]
    %v373 = vld [vmem:[%s8] sm:$0xff]
    %v374 = vld [vmem:[%s8 + $0x8] sm:$0xff]
    %v376 = vsel %vm233, %v358, 0
    %378 = vmatprep.subr.mxu0 0.0
    %379 = vmatpush1.msra.mxu0 %v365
    %380 = vmatprep.subr.mxu0 0.0
    %381 = vmatpush1.msra.mxu0 %v366
    %382 = vmatprep.subr.mxu0 0.0
    %383 = vmatpush1.msra.mxu0 %v367
    %384 = vmatprep.subr.mxu0 0.0
    %385 = vmatpush1.msra.mxu0 %v368
    %386 = vmatprep.subr.mxu0 0.0
    %387 = vmatpush1.msra.mxu0 %v369
    %388 = vmatprep.subr.mxu0 0.0
    %389 = vmatpush1.msra.mxu0 %v370
    %390 = vmatprep.subr.mxu0 0.0
    %391 = vmatpush1.msra.mxu0 %v371
    %392 = vmatprep.subr.mxu0 0.0
    %393 = vmatpush1.msra.mxu0 %v372
    %394 = vmatprep.subr.mxu0 0.0
    %395 = vmatpush1.msra.mxu0 0.0
    %396 = vmatprep.subr.mxu0 0.0
    %397 = vmatpush1.msra.mxu0 0.0
    %398 = vmatprep.subr.mxu0 0.0
    %399 = vmatpush1.msra.mxu0 0.0
    %400 = vmatprep.subr.mxu0 0.0
    %401 = vmatpush1.msra.mxu0 0.0
    %402 = vmatprep.subr.mxu0 0.0
    %403 = vmatpush1.msra.mxu0 0.0
    %404 = vmatprep.subr.mxu0 0.0
    %405 = vmatpush1.msra.mxu0 0.0
    %406 = vmatprep.subr.mxu0 0.0
    %407 = vmatpush1.msra.mxu0 0.0
    %408 = vmatprep.subr.mxu0 0.0
    %409 = vmatpush1.msra.mxu0 0.0
    %410 = vmatprep.subr.mxu0 0.0
    %411 = vmatpush1.msra.mxu0 0.0
    %412 = vmatprep.subr.mxu0 0.0
    %413 = vmatpush1.msra.mxu0 0.0
    %414 = vmatprep.subr.mxu0 0.0
    %415 = vmatpush1.msra.mxu0 0.0
    %416 = vmatprep.subr.mxu0 0.0
    %417 = vmatpush1.msra.mxu0 0.0
    %418 = vmatprep.subr.mxu0 0.0
    %419 = vmatpush1.msra.mxu0 0.0
    %420 = vmatprep.subr.mxu0 0.0
    %421 = vmatpush1.msra.mxu0 0.0
    %422 = vmatprep.subr.mxu0 0.0
    %423 = vmatpush1.msra.mxu0 0.0
    %424 = vmatprep.subr.mxu0 0.0
    %425 = vmatpush1.msra.mxu0 0.0
    %426 = vmatprep.subr.mxu0 0.0
    %427 = vmatpush1.msra.mxu0 0.0
    %428 = vmatprep.subr.mxu0 0.0
    %429 = vmatpush1.msra.mxu0 0.0
    %430 = vmatprep.subr.mxu0 0.0
    %431 = vmatpush1.msra.mxu0 0.0
    %432 = vmatprep.subr.mxu0 0.0
    %433 = vmatpush1.msra.mxu0 0.0
    %434 = vmatprep.subr.mxu0 0.0
    %435 = vmatpush1.msra.mxu0 0.0
    %436 = vmatprep.subr.mxu0 0.0
    %437 = vmatpush1.msra.mxu0 0.0
    %438 = vmatprep.subr.mxu0 0.0
    %439 = vmatpush1.msra.mxu0 0.0
    %440 = vmatprep.subr.mxu0 0.0
    %441 = vmatpush1.msra.mxu0 0.0
    %442 = vmatprep.mubr.f32.mxu0 0.0
    %443 = vmatmul.mubr.f32.gmra.mrb[0].mxu0 %v376
    %v444 = vpop.f32.mrb[0].mxu0
    %v445 = vadd.f32 0.0, %v444
    %v446 = vpop.f32.mrb[0].mxu0
    %447 = vdwg.mxu0
    %vm448 = vcmask 123904
    %v449 = vsel %vm448, %v445, 0.0
    %v450 = vrot.slane %v449, 4
    %v451 = vadd.f32 %v449, %v450
    %v452 = vrot.slane %v451, 2
    %v453 = vadd.f32 %v451, %v452
    %v454 = vrot.slane %v453, 1
    %v455 = vadd.f32 %v453, %v454
    %v456 = vmul.f32 %v455, 0.125
    %vm457 = vcmask 130048
    %v459 = vsel %vm457, %v456, 0
    %461 = vmatprep.subr.mxu0 0.0
    %462 = vmatpush1.msra.mxu0 %v373
    %463 = vmatprep.subr.mxu0 0.0
    %464 = vmatpush1.msra.mxu0 %v374
    %465 = vmatprep.subr.mxu0 0.0
    %466 = vmatpush1.msra.mxu0 0.0
    %467 = vmatprep.subr.mxu0 0.0
    %468 = vmatpush1.msra.mxu0 0.0
    %469 = vmatprep.subr.mxu0 0.0
    %470 = vmatpush1.msra.mxu0 0.0
    %471 = vmatprep.subr.mxu0 0.0
    %472 = vmatpush1.msra.mxu0 0.0
    %473 = vmatprep.subr.mxu0 0.0
    %474 = vmatpush1.msra.mxu0 0.0
    %475 = vmatprep.subr.mxu0 0.0
    %476 = vmatpush1.msra.mxu0 0.0
    %477 = vmatprep.subr.mxu0 0.0
    %478 = vmatpush1.msra.mxu0 0.0
    %479 = vmatprep.subr.mxu0 0.0
    %480 = vmatpush1.msra.mxu0 0.0
    %481 = vmatprep.subr.mxu0 0.0
    %482 = vmatpush1.msra.mxu0 0.0
    %483 = vmatprep.subr.mxu0 0.0
    %484 = vmatpush1.msra.mxu0 0.0
    %485 = vmatprep.subr.mxu0 0.0
    %486 = vmatpush1.msra.mxu0 0.0
    %487 = vmatprep.subr.mxu0 0.0
    %488 = vmatpush1.msra.mxu0 0.0
    %489 = vmatprep.subr.mxu0 0.0
    %490 = vmatpush1.msra.mxu0 0.0
    %491 = vmatprep.subr.mxu0 0.0
    %492 = vmatpush1.msra.mxu0 0.0
    %493 = vmatprep.subr.mxu0 0.0
    %494 = vmatpush1.msra.mxu0 0.0
    %495 = vmatprep.subr.mxu0 0.0
    %496 = vmatpush1.msra.mxu0 0.0
    %497 = vmatprep.subr.mxu0 0.0
    %498 = vmatpush1.msra.mxu0 0.0
    %499 = vmatprep.subr.mxu0 0.0
    %500 = vmatpush1.msra.mxu0 0.0
    %501 = vmatprep.subr.mxu0 0.0
    %502 = vmatpush1.msra.mxu0 0.0
    %503 = vmatprep.subr.mxu0 0.0
    %504 = vmatpush1.msra.mxu0 0.0
    %505 = vmatprep.subr.mxu0 0.0
    %506 = vmatpush1.msra.mxu0 0.0
    %507 = vmatprep.subr.mxu0 0.0
    %508 = vmatpush1.msra.mxu0 0.0
    %509 = vmatprep.subr.mxu0 0.0
    %510 = vmatpush1.msra.mxu0 0.0
    %511 = vmatprep.subr.mxu0 0.0
    %512 = vmatpush1.msra.mxu0 0.0
    %513 = vmatprep.subr.mxu0 0.0
    %514 = vmatpush1.msra.mxu0 0.0
    %515 = vmatprep.subr.mxu0 0.0
    %516 = vmatpush1.msra.mxu0 0.0
    %517 = vmatprep.subr.mxu0 0.0
    %518 = vmatpush1.msra.mxu0 0.0
    %519 = vmatprep.subr.mxu0 0.0
    %520 = vmatpush1.msra.mxu0 0.0
    %521 = vmatprep.subr.mxu0 0.0
    %522 = vmatpush1.msra.mxu0 0.0
    %523 = vmatprep.subr.mxu0 0.0
    %524 = vmatpush1.msra.mxu0 0.0
    %525 = vmatprep.mubr.f32.mxu0 0.0
    %526 = vmatmul.mubr.f32.gmra.mrb[0].mxu0 %v459
    %v527 = vpop.f32.mrb[0].mxu0
    %v528 = vadd.f32 0.0, %v527
    %v529 = vpop.f32.mrb[0].mxu0
    %530 = vdwg.mxu0
    %v531 = vlaneseq
    %v532 = vshrl.u32 %v531, 7
    %v533 = vsub.s32 0, %v532
    %v534 = vrot.slane %v528, %v533
    %v535 = vsub.f32 %v358, %v534
    %v536 = vmul.f32 %v535, %v535
    %v538 = vsel %vm233, %v536, 0
    %540 = vmatprep.subr.mxu0 0.0
    %541 = vmatpush1.msra.mxu0 %v365
    %542 = vmatprep.subr.mxu0 0.0
    %543 = vmatpush1.msra.mxu0 %v366
    %544 = vmatprep.subr.mxu0 0.0
    %545 = vmatpush1.msra.mxu0 %v367
    %546 = vmatprep.subr.mxu0 0.0
    %547 = vmatpush1.msra.mxu0 %v368
    %548 = vmatprep.subr.mxu0 0.0
    %549 = vmatpush1.msra.mxu0 %v369
    %550 = vmatprep.subr.mxu0 0.0
    %551 = vmatpush1.msra.mxu0 %v370
    %552 = vmatprep.subr.mxu0 0.0
    %553 = vmatpush1.msra.mxu0 %v371
    %554 = vmatprep.subr.mxu0 0.0
    %555 = vmatpush1.msra.mxu0 %v372
    %556 = vmatprep.subr.mxu0 0.0
    %557 = vmatpush1.msra.mxu0 0.0
    %558 = vmatprep.subr.mxu0 0.0
    %559 = vmatpush1.msra.mxu0 0.0
    %560 = vmatprep.subr.mxu0 0.0
    %561 = vmatpush1.msra.mxu0 0.0
    %562 = vmatprep.subr.mxu0 0.0
    %563 = vmatpush1.msra.mxu0 0.0
    %564 = vmatprep.subr.mxu0 0.0
    %565 = vmatpush1.msra.mxu0 0.0
    %566 = vmatprep.subr.mxu0 0.0
    %567 = vmatpush1.msra.mxu0 0.0
    %568 = vmatprep.subr.mxu0 0.0
    %569 = vmatpush1.msra.mxu0 0.0
    %570 = vmatprep.subr.mxu0 0.0
    %571 = vmatpush1.msra.mxu0 0.0
    %572 = vmatprep.subr.mxu0 0.0
    %573 = vmatpush1.msra.mxu0 0.0
    %574 = vmatprep.subr.mxu0 0.0
    %575 = vmatpush1.msra.mxu0 0.0
    %576 = vmatprep.subr.mxu0 0.0
    %577 = vmatpush1.msra.mxu0 0.0
    %578 = vmatprep.subr.mxu0 0.0
    %579 = vmatpush1.msra.mxu0 0.0
    %580 = vmatprep.subr.mxu0 0.0
    %581 = vmatpush1.msra.mxu0 0.0
    %582 = vmatprep.subr.mxu0 0.0
    %583 = vmatpush1.msra.mxu0 0.0
    %584 = vmatprep.subr.mxu0 0.0
    %585 = vmatpush1.msra.mxu0 0.0
    %586 = vmatprep.subr.mxu0 0.0
    %587 = vmatpush1.msra.mxu0 0.0
    %588 = vmatprep.subr.mxu0 0.0
    %589 = vmatpush1.msra.mxu0 0.0
    %590 = vmatprep.subr.mxu0 0.0
    %591 = vmatpush1.msra.mxu0 0.0
    %592 = vmatprep.subr.mxu0 0.0
    %593 = vmatpush1.msra.mxu0 0.0
    %594 = vmatprep.subr.mxu0 0.0
    %595 = vmatpush1.msra.mxu0 0.0
    %596 = vmatprep.subr.mxu0 0.0
    %597 = vmatpush1.msra.mxu0 0.0
    %598 = vmatprep.subr.mxu0 0.0
    %599 = vmatpush1.msra.mxu0 0.0
    %600 = vmatprep.subr.mxu0 0.0
    %601 = vmatpush1.msra.mxu0 0.0
    %602 = vmatprep.subr.mxu0 0.0
    %603 = vmatpush1.msra.mxu0 0.0
    %604 = vmatprep.mubr.f32.mxu0 0.0
    %605 = vmatmul.mubr.f32.gmra.mrb[0].mxu0 %v538
    %v606 = vpop.f32.mrb[0].mxu0
    %v607 = vadd.f32 0.0, %v606
    %v608 = vpop.f32.mrb[0].mxu0
    %609 = vdwg.mxu0
    %v610 = vsel %vm448, %v607, 0.0
    %v611 = vrot.slane %v610, 4
    %v612 = vadd.f32 %v610, %v611
    %v613 = vrot.slane %v612, 2
    %v614 = vadd.f32 %v612, %v613
    %v615 = vrot.slane %v614, 1
    %v616 = vadd.f32 %v614, %v615
    %v617 = vmul.f32 %v616, 0.125
    %v618 = vadd.f32 %v617, 1e-05
    %v619 = vrsqrt.pop %v618
    %v620 = vmul.f32 %v363, %v619
    %v622 = vsel %vm457, %v620, 0
    %624 = vmatprep.subr.mxu0 0.0
    %625 = vmatpush1.msra.mxu0 %v373
    %626 = vmatprep.subr.mxu0 0.0
    %627 = vmatpush1.msra.mxu0 %v374
    %628 = vmatprep.subr.mxu0 0.0
    %629 = vmatpush1.msra.mxu0 0.0
    %630 = vmatprep.subr.mxu0 0.0
    %631 = vmatpush1.msra.mxu0 0.0
    %632 = vmatprep.subr.mxu0 0.0
    %633 = vmatpush1.msra.mxu0 0.0
    %634 = vmatprep.subr.mxu0 0.0
    %635 = vmatpush1.msra.mxu0 0.0
    %636 = vmatprep.subr.mxu0 0.0
    %637 = vmatpush1.msra.mxu0 0.0
    %638 = vmatprep.subr.mxu0 0.0
    %639 = vmatpush1.msra.mxu0 0.0
    %640 = vmatprep.subr.mxu0 0.0
    %641 = vmatpush1.msra.mxu0 0.0
    %642 = vmatprep.subr.mxu0 0.0
    %643 = vmatpush1.msra.mxu0 0.0
    %644 = vmatprep.subr.mxu0 0.0
    %645 = vmatpush1.msra.mxu0 0.0
    %646 = vmatprep.subr.mxu0 0.0
    %647 = vmatpush1.msra.mxu0 0.0
    %648 = vmatprep.subr.mxu0 0.0
    %649 = vmatpush1.msra.mxu0 0.0
    %650 = vmatprep.subr.mxu0 0.0
    %651 = vmatpush1.msra.mxu0 0.0
    %652 = vmatprep.subr.mxu0 0.0
    %653 = vmatpush1.msra.mxu0 0.0
    %654 = vmatprep.subr.mxu0 0.0
    %655 = vmatpush1.msra.mxu0 0.0
    %656 = vmatprep.subr.mxu0 0.0
    %657 = vmatpush1.msra.mxu0 0.0
    %658 = vmatprep.subr.mxu0 0.0
    %659 = vmatpush1.msra.mxu0 0.0
    %660 = vmatprep.subr.mxu0 0.0
    %661 = vmatpush1.msra.mxu0 0.0
    %662 = vmatprep.subr.mxu0 0.0
    %663 = vmatpush1.msra.mxu0 0.0
    %664 = vmatprep.subr.mxu0 0.0
    %665 = vmatpush1.msra.mxu0 0.0
    %666 = vmatprep.subr.mxu0 0.0
    %667 = vmatpush1.msra.mxu0 0.0
    %668 = vmatprep.subr.mxu0 0.0
    %669 = vmatpush1.msra.mxu0 0.0
    %670 = vmatprep.subr.mxu0 0.0
    %671 = vmatpush1.msra.mxu0 0.0
    %672 = vmatprep.subr.mxu0 0.0
    %673 = vmatpush1.msra.mxu0 0.0
    %674 = vmatprep.subr.mxu0 0.0
    %675 = vmatpush1.msra.mxu0 0.0
    %676 = vmatprep.subr.mxu0 0.0
    %677 = vmatpush1.msra.mxu0 0.0
    %678 = vmatprep.subr.mxu0 0.0
    %679 = vmatpush1.msra.mxu0 0.0
    %680 = vmatprep.subr.mxu0 0.0
    %681 = vmatpush1.msra.mxu0 0.0
    %682 = vmatprep.subr.mxu0 0.0
    %683 = vmatpush1.msra.mxu0 0.0
    %684 = vmatprep.subr.mxu0 0.0
    %685 = vmatpush1.msra.mxu0 0.0
    %686 = vmatprep.subr.mxu0 0.0
    %687 = vmatpush1.msra.mxu0 0.0
    %688 = vmatprep.mubr.f32.mxu0 0.0
    %689 = vmatmul.mubr.f32.gmra.mrb[0].mxu0 %v622
    %v690 = vpop.f32.mrb[0].mxu0
    %v691 = vadd.f32 0.0, %v690
    %v692 = vpop.f32.mrb[0].mxu0
    %693 = vdwg.mxu0
    %v694 = vlaneseq
    %v695 = vshrl.u32 %v694, 7
    %v696 = vsub.s32 0, %v695
    %v697 = vrot.slane %v691, %v696
    %v698 = vmul.f32 %v535, %v697
    %v700 = vlaneseq
    %v701 = vshrl.u32 %v700, 7
    %v702 = vsub.s32 0, %v701
    %v703 = vrot.slane %v364, %v702
    %v705 = vadd.f32 %v698, %v703
    %vm706 = vcmp.ge.f32.partialorder %v705, 0.0
    %v707 = vmul.f32 %v705, 0.2
    %v708 = vsel %vm706, %v705, %v707
    %v709 = vpack.c.bf16 %v708, %v708
    %v710 = vld [vmem:[%s9] sm:$0xf]
    %v711 = vld [vmem:[%s9 + $0x4] sm:$0xf]
    %v712 = vld [vmem:[%s9 + $0x8] sm:$0xf]
    %v713 = vld [vmem:[%s9 + $0xc] sm:$0xf]
    %v714 = vld [vmem:[%s9 + $0x10] sm:$0xf]
    %v715 = vld [vmem:[%s9 + $0x14] sm:$0xf]
    %v716 = vld [vmem:[%s9 + $0x18] sm:$0xf]
    %v717 = vld [vmem:[%s9 + $0x1c] sm:$0xf]
    %v718 = vld [vmem:[#allocation11] sm:$0x1]
    %v720 = vlaneseq
    %v721 = vshrl.u32 %v720, 7
    %v722 = vsub.s32 0, %v721
    %v723 = vrot.slane %v718, %v722
    %v733 = vunpack.c.l.b16 %v710
    %v734 = vunpack.c.l.b16 %v711
    %v735 = vunpack.c.l.b16 %v712
    %v736 = vunpack.c.l.b16 %v713
    %v737 = vunpack.c.l.b16 %v714
    %v738 = vunpack.c.l.b16 %v715
    %v739 = vunpack.c.l.b16 %v716
    %v740 = vunpack.c.l.b16 %v717
    %v741 = vpack.c.b16 %v734, %v733
    %v742 = vpack.c.b16 %v736, %v735
    %v743 = vpack.c.b16 %v738, %v737
    %v744 = vpack.c.b16 %v740, %v739
    %v750 = vsel %vm233, %v709, 0
    %752 = vmatprep.subr.bf16.mxu0 0
    %753 = vmatpush1.bf16.msra.mxu0 %v741
    %754 = vmatprep.subr.bf16.mxu0 0
    %755 = vmatpush1.bf16.msra.mxu0 %v742
    %756 = vmatprep.subr.bf16.mxu0 0
    %757 = vmatpush1.bf16.msra.mxu0 %v743
    %758 = vmatprep.subr.bf16.mxu0 0
    %759 = vmatpush1.bf16.msra.mxu0 %v744
    %760 = vmatprep.subr.bf16.mxu0 0
    %761 = vmatpush1.bf16.msra.mxu0 0
    %762 = vmatprep.subr.bf16.mxu0 0
    %763 = vmatpush1.bf16.msra.mxu0 0
    %764 = vmatprep.subr.bf16.mxu0 0
    %765 = vmatpush1.bf16.msra.mxu0 0
    %766 = vmatprep.subr.bf16.mxu0 0
    %767 = vmatpush1.bf16.msra.mxu0 0
    %768 = vmatprep.subr.bf16.mxu0 0
    %769 = vmatpush1.bf16.msra.mxu0 0
    %770 = vmatprep.subr.bf16.mxu0 0
    %771 = vmatpush1.bf16.msra.mxu0 0
    %772 = vmatprep.subr.bf16.mxu0 0
    %773 = vmatpush1.bf16.msra.mxu0 0
    %774 = vmatprep.subr.bf16.mxu0 0
    %775 = vmatpush1.bf16.msra.mxu0 0
    %776 = vmatprep.subr.bf16.mxu0 0
    %777 = vmatpush1.bf16.msra.mxu0 0
    %778 = vmatprep.subr.bf16.mxu0 0
    %779 = vmatpush1.bf16.msra.mxu0 0
    %780 = vmatprep.subr.bf16.mxu0 0
    %781 = vmatpush1.bf16.msra.mxu0 0
    %782 = vmatprep.subr.bf16.mxu0 0
    %783 = vmatpush1.bf16.msra.mxu0 0
    %784 = vmatprep.mubr.bf16.mxu0 0
    %785 = vmatmul.mubr.bf16.gmra.mrb[0].mxu0 %v750
    %v786 = vpop.f32.mrb[0].mxu0
    %v787 = vadd.f32 %v723, %v786
    %v788 = vpop.f32.mrb[0].mxu0
    %v789 = vpop.f32.mrb[0].mxu0
    %v790 = vpop.f32.mrb[0].mxu0
    %791 = vdwg.mxu0
    %v792 = vld [vmem:[#allocation13] sm:$0x1]
    %v793 = vld [vmem:[#allocation14] sm:$0x1]
    %v794 = vld [vmem:[%s13] sm:$0xff]
    %v795 = vld [vmem:[%s13 + $0x8] sm:$0xff]
    %v796 = vld [vmem:[%s13 + $0x10] sm:$0xff]
    %v797 = vld [vmem:[%s13 + $0x18] sm:$0xff]
    %v798 = vld [vmem:[%s13 + $0x20] sm:$0xff]
    %v799 = vld [vmem:[%s13 + $0x28] sm:$0xff]
    %v800 = vld [vmem:[%s13 + $0x30] sm:$0xff]
    %v801 = vld [vmem:[%s13 + $0x38] sm:$0xff]
    %v802 = vld [vmem:[#allocation16] sm:$0xff]
    %v803 = vld [vmem:[#allocation16 + $0x8] sm:$0xff]
    %v804 = vld [vmem:[#allocation16 + $0x10] sm:$0xff]
    %v805 = vld [vmem:[#allocation16 + $0x18] sm:$0xff]
    %v807 = vsel %vm233, %v787, 0
    %809 = vmatprep.subr.mxu0 0.0
    %810 = vmatpush1.msra.mxu0 %v794
    %811 = vmatprep.subr.mxu0 0.0
    %812 = vmatpush1.msra.mxu0 %v795
    %813 = vmatprep.subr.mxu0 0.0
    %814 = vmatpush1.msra.mxu0 %v796
    %815 = vmatprep.subr.mxu0 0.0
    %816 = vmatpush1.msra.mxu0 %v797
    %817 = vmatprep.subr.mxu0 0.0
    %818 = vmatpush1.msra.mxu0 %v798
    %819 = vmatprep.subr.mxu0 0.0
    %820 = vmatpush1.msra.mxu0 %v799
    %821 = vmatprep.subr.mxu0 0.0
    %822 = vmatpush1.msra.mxu0 %v800
    %823 = vmatprep.subr.mxu0 0.0
    %824 = vmatpush1.msra.mxu0 %v801
    %825 = vmatprep.subr.mxu0 0.0
    %826 = vmatpush1.msra.mxu0 0.0
    %827 = vmatprep.subr.mxu0 0.0
    %828 = vmatpush1.msra.mxu0 0.0
    %829 = vmatprep.subr.mxu0 0.0
    %830 = vmatpush1.msra.mxu0 0.0
    %831 = vmatprep.subr.mxu0 0.0
    %832 = vmatpush1.msra.mxu0 0.0
    %833 = vmatprep.subr.mxu0 0.0
    %834 = vmatpush1.msra.mxu0 0.0
    %835 = vmatprep.subr.mxu0 0.0
    %836 = vmatpush1.msra.mxu0 0.0
    %837 = vmatprep.subr.mxu0 0.0
    %838 = vmatpush1.msra.mxu0 0.0
    %839 = vmatprep.subr.mxu0 0.0
    %840 = vmatpush1.msra.mxu0 0.0
    %841 = vmatprep.subr.mxu0 0.0
    %842 = vmatpush1.msra.mxu0 0.0
    %843 = vmatprep.subr.mxu0 0.0
    %844 = vmatpush1.msra.mxu0 0.0
    %845 = vmatprep.subr.mxu0 0.0
    %846 = vmatpush1.msra.mxu0 0.0
    %847 = vmatprep.subr.mxu0 0.0
    %848 = vmatpush1.msra.mxu0 0.0
    %849 = vmatprep.subr.mxu0 0.0
    %850 = vmatpush1.msra.mxu0 0.0
    %851 = vmatprep.subr.mxu0 0.0
    %852 = vmatpush1.msra.mxu0 0.0
    %853 = vmatprep.subr.mxu0 0.0
    %854 = vmatpush1.msra.mxu0 0.0
    %855 = vmatprep.subr.mxu0 0.0
    %856 = vmatpush1.msra.mxu0 0.0
    %857 = vmatprep.subr.mxu0 0.0
    %858 = vmatpush1.msra.mxu0 0.0
    %859 = vmatprep.subr.mxu0 0.0
    %860 = vmatpush1.msra.mxu0 0.0
    %861 = vmatprep.subr.mxu0 0.0
    %862 = vmatpush1.msra.mxu0 0.0
    %863 = vmatprep.subr.mxu0 0.0
    %864 = vmatpush1.msra.mxu0 0.0
    %865 = vmatprep.subr.mxu0 0.0
    %866 = vmatpush1.msra.mxu0 0.0
    %867 = vmatprep.subr.mxu0 0.0
    %868 = vmatpush1.msra.mxu0 0.0
    %869 = vmatprep.subr.mxu0 0.0
    %870 = vmatpush1.msra.mxu0 0.0
    %871 = vmatprep.subr.mxu0 0.0
    %872 = vmatpush1.msra.mxu0 0.0
    %873 = vmatprep.mubr.f32.mxu0 0.0
    %874 = vmatmul.mubr.f32.gmra.mrb[0].mxu0 %v807
    %v875 = vpop.f32.mrb[0].mxu0
    %v876 = vadd.f32 0.0, %v875
    %v877 = vpop.f32.mrb[0].mxu0
    %878 = vdwg.mxu0
    %vm879 = vcmask 254976
    %v880 = vsel %vm879, %v876, 0.0
    %v881 = vrot.slane %v880, 4
    %v882 = vadd.f32 %v880, %v881
    %v883 = vrot.slane %v882, 2
    %v884 = vadd.f32 %v882, %v883
    %v885 = vrot.slane %v884, 1
    %v886 = vadd.f32 %v884, %v885
    %v887 = vmul.f32 %v886, 0.25
    %vm888 = vcmask 261120
    %v890 = vsel %vm888, %v887, 0
    %892 = vmatprep.subr.mxu0 0.0
    %893 = vmatpush1.msra.mxu0 %v802
    %894 = vmatprep.subr.mxu0 0.0
    %895 = vmatpush1.msra.mxu0 %v803
    %896 = vmatprep.subr.mxu0 0.0
    %897 = vmatpush1.msra.mxu0 %v804
    %898 = vmatprep.subr.mxu0 0.0
    %899 = vmatpush1.msra.mxu0 %v805
    %900 = vmatprep.subr.mxu0 0.0
    %901 = vmatpush1.msra.mxu0 0.0
    %902 = vmatprep.subr.mxu0 0.0
    %903 = vmatpush1.msra.mxu0 0.0
    %904 = vmatprep.subr.mxu0 0.0
    %905 = vmatpush1.msra.mxu0 0.0
    %906 = vmatprep.subr.mxu0 0.0
    %907 = vmatpush1.msra.mxu0 0.0
    %908 = vmatprep.subr.mxu0 0.0
    %909 = vmatpush1.msra.mxu0 0.0
    %910 = vmatprep.subr.mxu0 0.0
    %911 = vmatpush1.msra.mxu0 0.0
    %912 = vmatprep.subr.mxu0 0.0
    %913 = vmatpush1.msra.mxu0 0.0
    %914 = vmatprep.subr.mxu0 0.0
    %915 = vmatpush1.msra.mxu0 0.0
    %916 = vmatprep.subr.mxu0 0.0
    %917 = vmatpush1.msra.mxu0 0.0
    %918 = vmatprep.subr.mxu0 0.0
    %919 = vmatpush1.msra.mxu0 0.0
    %920 = vmatprep.subr.mxu0 0.0
    %921 = vmatpush1.msra.mxu0 0.0
    %922 = vmatprep.subr.mxu0 0.0
    %923 = vmatpush1.msra.mxu0 0.0
    %924 = vmatprep.subr.mxu0 0.0
    %925 = vmatpush1.msra.mxu0 0.0
    %926 = vmatprep.subr.mxu0 0.0
    %927 = vmatpush1.msra.mxu0 0.0
    %928 = vmatprep.subr.mxu0 0.0
    %929 = vmatpush1.msra.mxu0 0.0
    %930 = vmatprep.subr.mxu0 0.0
    %931 = vmatpush1.msra.mxu0 0.0
    %932 = vmatprep.subr.mxu0 0.0
    %933 = vmatpush1.msra.mxu0 0.0
    %934 = vmatprep.subr.mxu0 0.0
    %935 = vmatpush1.msra.mxu0 0.0
    %936 = vmatprep.subr.mxu0 0.0
    %937 = vmatpush1.msra.mxu0 0.0
    %938 = vmatprep.subr.mxu0 0.0
    %939 = vmatpush1.msra.mxu0 0.0
    %940 = vmatprep.subr.mxu0 0.0
    %941 = vmatpush1.msra.mxu0 0.0
    %942 = vmatprep.subr.mxu0 0.0
    %943 = vmatpush1.msra.mxu0 0.0
    %944 = vmatprep.subr.mxu0 0.0
    %945 = vmatpush1.msra.mxu0 0.0
    %946 = vmatprep.subr.mxu0 0.0
    %947 = vmatpush1.msra.mxu0 0.0
    %948 = vmatprep.subr.mxu0 0.0
    %949 = vmatpush1.msra.mxu0 0.0
    %950 = vmatprep.subr.mxu0 0.0
    %951 = vmatpush1.msra.mxu0 0.0
    %952 = vmatprep.subr.mxu0 0.0
    %953 = vmatpush1.msra.mxu0 0.0
    %954 = vmatprep.subr.mxu0 0.0
    %955 = vmatpush1.msra.mxu0 0.0
    %956 = vmatprep.mubr.f32.mxu0 0.0
    %957 = vmatmul.mubr.f32.gmra.mrb[0].mxu0 %v890
    %v958 = vpop.f32.mrb[0].mxu0
    %v959 = vadd.f32 0.0, %v958
    %v960 = vpop.f32.mrb[0].mxu0
    %961 = vdwg.mxu0
    %v962 = vlaneseq
    %v963 = vshrl.u32 %v962, 7
    %v964 = vsub.s32 0, %v963
    %v965 = vrot.slane %v959, %v964
    %v966 = vsub.f32 %v787, %v965
    %v967 = vmul.f32 %v966, %v966
    %v969 = vsel %vm233, %v967, 0
    %971 = vmatprep.subr.mxu0 0.0
    %972 = vmatpush1.msra.mxu0 %v794
    %973 = vmatprep.subr.mxu0 0.0
    %974 = vmatpush1.msra.mxu0 %v795
    %975 = vmatprep.subr.mxu0 0.0
    %976 = vmatpush1.msra.mxu0 %v796
    %977 = vmatprep.subr.mxu0 0.0
    %978 = vmatpush1.msra.mxu0 %v797
    %979 = vmatprep.subr.mxu0 0.0
    %980 = vmatpush1.msra.mxu0 %v798
    %981 = vmatprep.subr.mxu0 0.0
    %982 = vmatpush1.msra.mxu0 %v799
    %983 = vmatprep.subr.mxu0 0.0
    %984 = vmatpush1.msra.mxu0 %v800
    %985 = vmatprep.subr.mxu0 0.0
    %986 = vmatpush1.msra.mxu0 %v801
    %987 = vmatprep.subr.mxu0 0.0
    %988 = vmatpush1.msra.mxu0 0.0
    %989 = vmatprep.subr.mxu0 0.0
    %990 = vmatpush1.msra.mxu0 0.0
    %991 = vmatprep.subr.mxu0 0.0
    %992 = vmatpush1.msra.mxu0 0.0
    %993 = vmatprep.subr.mxu0 0.0
    %994 = vmatpush1.msra.mxu0 0.0
    %995 = vmatprep.subr.mxu0 0.0
    %996 = vmatpush1.msra.mxu0 0.0
    %997 = vmatprep.subr.mxu0 0.0
    %998 = vmatpush1.msra.mxu0 0.0
    %999 = vmatprep.subr.mxu0 0.0
    %1000 = vmatpush1.msra.mxu0 0.0
    %1001 = vmatprep.subr.mxu0 0.0
    %1002 = vmatpush1.msra.mxu0 0.0
    %1003 = vmatprep.subr.mxu0 0.0
    %1004 = vmatpush1.msra.mxu0 0.0
    %1005 = vmatprep.subr.mxu0 0.0
    %1006 = vmatpush1.msra.mxu0 0.0
    %1007 = vmatprep.subr.mxu0 0.0
    %1008 = vmatpush1.msra.mxu0 0.0
    %1009 = vmatprep.subr.mxu0 0.0
    %1010 = vmatpush1.msra.mxu0 0.0
    %1011 = vmatprep.subr.mxu0 0.0
    %1012 = vmatpush1.msra.mxu0 0.0
    %1013 = vmatprep.subr.mxu0 0.0
    %1014 = vmatpush1.msra.mxu0 0.0
    %1015 = vmatprep.subr.mxu0 0.0
    %1016 = vmatpush1.msra.mxu0 0.0
    %1017 = vmatprep.subr.mxu0 0.0
    %1018 = vmatpush1.msra.mxu0 0.0
    %1019 = vmatprep.subr.mxu0 0.0
    %1020 = vmatpush1.msra.mxu0 0.0
    %1021 = vmatprep.subr.mxu0 0.0
    %1022 = vmatpush1.msra.mxu0 0.0
    %1023 = vmatprep.subr.mxu0 0.0
    %1024 = vmatpush1.msra.mxu0 0.0
    %1025 = vmatprep.subr.mxu0 0.0
    %1026 = vmatpush1.msra.mxu0 0.0
    %1027 = vmatprep.subr.mxu0 0.0
    %1028 = vmatpush1.msra.mxu0 0.0
    %1029 = vmatprep.subr.mxu0 0.0
    %1030 = vmatpush1.msra.mxu0 0.0
    %1031 = vmatprep.subr.mxu0 0.0
    %1032 = vmatpush1.msra.mxu0 0.0
    %1033 = vmatprep.subr.mxu0 0.0
    %1034 = vmatpush1.msra.mxu0 0.0
    %1035 = vmatprep.mubr.f32.mxu0 0.0
    %1036 = vmatmul.mubr.f32.gmra.mrb[0].mxu0 %v969
    %v1037 = vpop.f32.mrb[0].mxu0
    %v1038 = vadd.f32 0.0, %v1037
    %v1039 = vpop.f32.mrb[0].mxu0
    %1040 = vdwg.mxu0
    %v1041 = vsel %vm879, %v1038, 0.0
    %v1042 = vrot.slane %v1041, 4
    %v1043 = vadd.f32 %v1041, %v1042
    %v1044 = vrot.slane %v1043, 2
    %v1045 = vadd.f32 %v1043, %v1044
    %v1046 = vrot.slane %v1045, 1
    %v1047 = vadd.f32 %v1045, %v1046
    %v1048 = vmul.f32 %v1047, 0.25
    %v1049 = vadd.f32 %v1048, 1e-05
    %v1050 = vrsqrt.pop %v1049
    %v1051 = vmul.f32 %v792, %v1050
    %v1053 = vsel %vm888, %v1051, 0
    %1055 = vmatprep.subr.mxu0 0.0
    %1056 = vmatpush1.msra.mxu0 %v802
    %1057 = vmatprep.subr.mxu0 0.0
    %1058 = vmatpush1.msra.mxu0 %v803
    %1059 = vmatprep.subr.mxu0 0.0
    %1060 = vmatpush1.msra.mxu0 %v804
    %1061 = vmatprep.subr.mxu0 0.0
    %1062 = vmatpush1.msra.mxu0 %v805
    %1063 = vmatprep.subr.mxu0 0.0
    %1064 = vmatpush1.msra.mxu0 0.0
    %1065 = vmatprep.subr.mxu0 0.0
    %1066 = vmatpush1.msra.mxu0 0.0
    %1067 = vmatprep.subr.mxu0 0.0
    %1068 = vmatpush1.msra.mxu0 0.0
    %1069 = vmatprep.subr.mxu0 0.0
    %1070 = vmatpush1.msra.mxu0 0.0
    %1071 = vmatprep.subr.mxu0 0.0
    %1072 = vmatpush1.msra.mxu0 0.0
    %1073 = vmatprep.subr.mxu0 0.0
    %1074 = vmatpush1.msra.mxu0 0.0
    %1075 = vmatprep.subr.mxu0 0.0
    %1076 = vmatpush1.msra.mxu0 0.0
    %1077 = vmatprep.subr.mxu0 0.0
    %1078 = vmatpush1.msra.mxu0 0.0
    %1079 = vmatprep.subr.mxu0 0.0
    %1080 = vmatpush1.msra.mxu0 0.0
    %1081 = vmatprep.subr.mxu0 0.0
    %1082 = vmatpush1.msra.mxu0 0.0
    %1083 = vmatprep.subr.mxu0 0.0
    %1084 = vmatpush1.msra.mxu0 0.0
    %1085 = vmatprep.subr.mxu0 0.0
    %1086 = vmatpush1.msra.mxu0 0.0
    %1087 = vmatprep.subr.mxu0 0.0
    %1088 = vmatpush1.msra.mxu0 0.0
    %1089 = vmatprep.subr.mxu0 0.0
    %1090 = vmatpush1.msra.mxu0 0.0
    %1091 = vmatprep.subr.mxu0 0.0
    %1092 = vmatpush1.msra.mxu0 0.0
    %1093 = vmatprep.subr.mxu0 0.0
    %1094 = vmatpush1.msra.mxu0 0.0
    %1095 = vmatprep.subr.mxu0 0.0
    %1096 = vmatpush1.msra.mxu0 0.0
    %1097 = vmatprep.subr.mxu0 0.0
    %1098 = vmatpush1.msra.mxu0 0.0
    %1099 = vmatprep.subr.mxu0 0.0
    %1100 = vmatpush1.msra.mxu0 0.0
    %1101 = vmatprep.subr.mxu0 0.0
    %1102 = vmatpush1.msra.mxu0 0.0
    %1103 = vmatprep.subr.mxu0 0.0
    %1104 = vmatpush1.msra.mxu0 0.0
    %1105 = vmatprep.subr.mxu0 0.0
    %1106 = vmatpush1.msra.mxu0 0.0
    %1107 = vmatprep.subr.mxu0 0.0
    %1108 = vmatpush1.msra.mxu0 0.0
    %1109 = vmatprep.subr.mxu0 0.0
    %1110 = vmatpush1.msra.mxu0 0.0
    %1111 = vmatprep.subr.mxu0 0.0
    %1112 = vmatpush1.msra.mxu0 0.0
    %1113 = vmatprep.subr.mxu0 0.0
    %1114 = vmatpush1.msra.mxu0 0.0
    %1115 = vmatprep.subr.mxu0 0.0
    %1116 = vmatpush1.msra.mxu0 0.0
    %1117 = vmatprep.subr.mxu0 0.0
    %1118 = vmatpush1.msra.mxu0 0.0
    %1119 = vmatprep.mubr.f32.mxu0 0.0
    %1120 = vmatmul.mubr.f32.gmra.mrb[0].mxu0 %v1053
    %v1121 = vpop.f32.mrb[0].mxu0
    %v1122 = vadd.f32 0.0, %v1121
    %v1123 = vpop.f32.mrb[0].mxu0
    %1124 = vdwg.mxu0
    %v1125 = vlaneseq
    %v1126 = vshrl.u32 %v1125, 7
    %v1127 = vsub.s32 0, %v1126
    %v1128 = vrot.slane %v1122, %v1127
    %v1129 = vmul.f32 %v966, %v1128
    %v1131 = vlaneseq
    %v1132 = vshrl.u32 %v1131, 7
    %v1133 = vsub.s32 0, %v1132
    %v1134 = vrot.slane %v793, %v1133
    %v1136 = vadd.f32 %v1129, %v1134
    %vm1137 = vcmp.ge.f32.partialorder %v1136, 0.0
    %v1138 = vmul.f32 %v1136, 0.2
    %v1139 = vsel %vm1137, %v1136, %v1138
    %v1140 = vpack.c.bf16 %v1139, %v1139
    %v1141 = vld [vmem:[#allocation17] sm:$0xf]
    %v1142 = vld [vmem:[#allocation17 + $0x4] sm:$0xf]
    %v1143 = vld [vmem:[#allocation17 + $0x8] sm:$0xf]
    %v1144 = vld [vmem:[#allocation17 + $0xc] sm:$0xf]
    %v1145 = vld [vmem:[#allocation17 + $0x10] sm:$0xf]
    %v1146 = vld [vmem:[#allocation17 + $0x14] sm:$0xf]
    %v1147 = vld [vmem:[#allocation17 + $0x18] sm:$0xf]
    %v1148 = vld [vmem:[#allocation17 + $0x1c] sm:$0xf]
    %v1149 = vld [vmem:[#allocation19] sm:$0x1]
    %v1151 = vlaneseq
    %v1152 = vshrl.u32 %v1151, 7
    %v1153 = vsub.s32 0, %v1152
    %v1154 = vrot.slane %v1149, %v1153
    %v1164 = vunpack.c.l.b16 %v1141
    %v1165 = vunpack.c.l.b16 %v1142
    %v1166 = vunpack.c.l.b16 %v1143
    %v1167 = vunpack.c.l.b16 %v1144
    %v1168 = vunpack.c.l.b16 %v1145
    %v1169 = vunpack.c.l.b16 %v1146
    %v1170 = vunpack.c.l.b16 %v1147
    %v1171 = vunpack.c.l.b16 %v1148
    %v1172 = vpack.c.b16 %v1165, %v1164
    %v1173 = vpack.c.b16 %v1167, %v1166
    %v1174 = vpack.c.b16 %v1169, %v1168
    %v1175 = vpack.c.b16 %v1171, %v1170
    %v1181 = vsel %vm233, %v1140, 0
    %1183 = vmatprep.subr.bf16.mxu0 0
    %1184 = vmatpush1.bf16.msra.mxu0 %v1172
    %1185 = vmatprep.subr.bf16.mxu0 0
    %1186 = vmatpush1.bf16.msra.mxu0 %v1173
    %1187 = vmatprep.subr.bf16.mxu0 0
    %1188 = vmatpush1.bf16.msra.mxu0 %v1174
    %1189 = vmatprep.subr.bf16.mxu0 0
    %1190 = vmatpush1.bf16.msra.mxu0 %v1175
    %1191 = vmatprep.subr.bf16.mxu0 0
    %1192 = vmatpush1.bf16.msra.mxu0 0
    %1193 = vmatprep.subr.bf16.mxu0 0
    %1194 = vmatpush1.bf16.msra.mxu0 0
    %1195 = vmatprep.subr.bf16.mxu0 0
    %1196 = vmatpush1.bf16.msra.mxu0 0
    %1197 = vmatprep.subr.bf16.mxu0 0
    %1198 = vmatpush1.bf16.msra.mxu0 0
    %1199 = vmatprep.subr.bf16.mxu0 0
    %1200 = vmatpush1.bf16.msra.mxu0 0
    %1201 = vmatprep.subr.bf16.mxu0 0
    %1202 = vmatpush1.bf16.msra.mxu0 0
    %1203 = vmatprep.subr.bf16.mxu0 0
    %1204 = vmatpush1.bf16.msra.mxu0 0
    %1205 = vmatprep.subr.bf16.mxu0 0
    %1206 = vmatpush1.bf16.msra.mxu0 0
    %1207 = vmatprep.subr.bf16.mxu0 0
    %1208 = vmatpush1.bf16.msra.mxu0 0
    %1209 = vmatprep.subr.bf16.mxu0 0
    %1210 = vmatpush1.bf16.msra.mxu0 0
    %1211 = vmatprep.subr.bf16.mxu0 0
    %1212 = vmatpush1.bf16.msra.mxu0 0
    %1213 = vmatprep.subr.bf16.mxu0 0
    %1214 = vmatpush1.bf16.msra.mxu0 0
    %1215 = vmatprep.mubr.bf16.mxu0 0
    %1216 = vmatmul.mubr.bf16.gmra.mrb[0].mxu0 %v1181
    %v1217 = vpop.f32.mrb[0].mxu0
    %v1218 = vadd.f32 %v1154, %v1217
    %v1219 = vpop.f32.mrb[0].mxu0
    %v1220 = vpop.f32.mrb[0].mxu0
    %v1221 = vpop.f32.mrb[0].mxu0
    %1222 = vdwg.mxu0
    %v1223 = vlaneseq
    %v1224 = vand.u32 %v1223, 127
    %vm1225 = vcmp.ge.s32.totalorder %v1224, 1
    %vm1226 = vcmp.lt.s32.totalorder %v1224, 9
    %vm1227 = vmand %vm1225, %vm1226
    %vm1228 = vcmp.lt.s32.totalorder %v1224, 6
    %vm1229 = vmand %vm1225, %vm1228
    %v1230 = vsel %vm1229, %v1218, -inf
    %vm1231 = vcmask 1041408
    %v1232 = vsel %vm1231, %v1230, -inf
    %1233 = vmax.xlane.f32.xlu0 %v1232
    %v1234 = vpop.xlane.xlu0 %1233
    %v1235 = vsel %vm1229, %v1234, 0.0
    %v1236 = vadd.f32 %v1235, 0.0
    %vm1237 = vcmp.ge.s32.totalorder %v1224, 6
    %vm1238 = vmand %vm1237, %vm1226
    %v1239 = vsel %vm1238, %v1218, -inf
    %v1240 = vsel %vm1231, %v1239, -inf
    %1241 = vmax.xlane.f32.xlu0 %v1240
    %v1242 = vpop.xlane.xlu0 %1241
    %v1243 = vsel %vm1238, %v1242, 0.0
    %v1244 = vadd.f32 %v1236, %v1243
    %v1245 = vsub.f32 %v1218, %v1244
    %v1246 = vmul.f32 %v1245, 1.442695
    %v1247 = vpow.pop %v1246
    %v1248 = vsel %vm1227, %v1247, 0.0
    %v1249 = vld [vmem:[%s17] sm:$0xff]
    %v1250 = vld [vmem:[%s17 + $0x8] sm:$0xff]
    %v1251 = vld [vmem:[%s17 + $0x10] sm:$0xff]
    %v1252 = vld [vmem:[%s17 + $0x18] sm:$0xff]
    %v1253 = vld [vmem:[%s17 + $0x20] sm:$0xff]
    %v1254 = vld [vmem:[%s17 + $0x28] sm:$0xff]
    %v1255 = vld [vmem:[%s17 + $0x30] sm:$0xff]
    %v1256 = vld [vmem:[%s17 + $0x38] sm:$0xff]
    %v1257 = vld [vmem:[%s17 + $0x40] sm:$0xff]
    %v1258 = vld [vmem:[%s17 + $0x48] sm:$0xff]
    %v1259 = vld [vmem:[%s17 + $0x50] sm:$0xff]
    %v1260 = vld [vmem:[%s17 + $0x58] sm:$0xff]
    %v1261 = vld [vmem:[%s17 + $0x60] sm:$0xff]
    %v1262 = vld [vmem:[%s17 + $0x68] sm:$0xff]
    %v1263 = vld [vmem:[%s17 + $0x70] sm:$0xff]
    %v1264 = vld [vmem:[%s17 + $0x78] sm:$0xff]
    %1265 = vmatprep.subr.mxu0 0.0
    %1266 = vmatpush1.msra.mxu0 %v1249
    %1267 = vmatprep.subr.mxu0 0.0
    %1268 = vmatpush1.msra.mxu0 %v1250
    %1269 = vmatprep.subr.mxu0 0.0
    %1270 = vmatpush1.msra.mxu0 %v1251
    %1271 = vmatprep.subr.mxu0 0.0
    %1272 = vmatpush1.msra.mxu0 %v1252
    %1273 = vmatprep.subr.mxu0 0.0
    %1274 = vmatpush1.msra.mxu0 %v1253
    %1275 = vmatprep.subr.mxu0 0.0
    %1276 = vmatpush1.msra.mxu0 %v1254
    %1277 = vmatprep.subr.mxu0 0.0
    %1278 = vmatpush1.msra.mxu0 %v1255
    %1279 = vmatprep.subr.mxu0 0.0
    %1280 = vmatpush1.msra.mxu0 %v1256
    %1281 = vmatprep.subr.mxu0 0.0
    %1282 = vmatpush1.msra.mxu0 %v1257
    %1283 = vmatprep.subr.mxu0 0.0
    %1284 = vmatpush1.msra.mxu0 %v1258
    %1285 = vmatprep.subr.mxu0 0.0
    %1286 = vmatpush1.msra.mxu0 %v1259
    %1287 = vmatprep.subr.mxu0 0.0
    %1288 = vmatpush1.msra.mxu0 %v1260
    %1289 = vmatprep.subr.mxu0 0.0
    %1290 = vmatpush1.msra.mxu0 %v1261
    %1291 = vmatprep.subr.mxu0 0.0
    %1292 = vmatpush1.msra.mxu0 %v1262
    %1293 = vmatprep.subr.mxu0 0.0
    %1294 = vmatpush1.msra.mxu0 %v1263
    %1295 = vmatprep.subr.mxu0 0.0
    %1296 = vmatpush1.msra.mxu0 %v1264
    %1297 = vmatprep.subr.mxu0 0.0
    %1298 = vmatpush1.msra.mxu0 0.0
    %1299 = vmatprep.subr.mxu0 0.0
    %1300 = vmatpush1.msra.mxu0 0.0
    %1301 = vmatprep.subr.mxu0 0.0
    %1302 = vmatpush1.msra.mxu0 0.0
    %1303 = vmatprep.subr.mxu0 0.0
    %1304 = vmatpush1.msra.mxu0 0.0
    %1305 = vmatprep.subr.mxu0 0.0
    %1306 = vmatpush1.msra.mxu0 0.0
    %1307 = vmatprep.subr.mxu0 0.0
    %1308 = vmatpush1.msra.mxu0 0.0
    %1309 = vmatprep.subr.mxu0 0.0
    %1310 = vmatpush1.msra.mxu0 0.0
    %1311 = vmatprep.subr.mxu0 0.0
    %1312 = vmatpush1.msra.mxu0 0.0
    %1313 = vmatprep.subr.mxu0 0.0
    %1314 = vmatpush1.msra.mxu0 0.0
    %1315 = vmatprep.subr.mxu0 0.0
    %1316 = vmatpush1.msra.mxu0 0.0
    %1317 = vmatprep.subr.mxu0 0.0
    %1318 = vmatpush1.msra.mxu0 0.0
    %1319 = vmatprep.subr.mxu0 0.0
    %1320 = vmatpush1.msra.mxu0 0.0
    %1321 = vmatprep.subr.mxu0 0.0
    %1322 = vmatpush1.msra.mxu0 0.0
    %1323 = vmatprep.subr.mxu0 0.0
    %1324 = vmatpush1.msra.mxu0 0.0
    %1325 = vmatprep.subr.mxu0 0.0
    %1326 = vmatpush1.msra.mxu0 0.0
    %1327 = vmatprep.subr.mxu0 0.0
    %1328 = vmatpush1.msra.mxu0 0.0
    %1329 = vmatprep.mubr.f32.mxu0 0.0
    %1330 = vmatmul.mubr.f32.gmra.mrb[0].mxu0 %v1248
    %v1331 = vpop.f32.mrb[0].mxu0
    %v1332 = vadd.f32 0.0, %v1331
    %v1333 = vpop.f32.mrb[0].mxu0
    %1334 = vdwg.mxu0
    %v1335 = vsel %vm1227, %v1332, 1.0
    %v1336 = vrcp.pop %v1335
    %v1337 = vmul.f32 %v1248, %v1336
    %v1338 = vmul.f32 %v1218, 0.5
    %v1339 = vtanh.pop %v1338
    %v1340 = vadd.f32 %v1339, 1.0
    %v1341 = vmul.f32 %v1340, 0.5
    %vm1342 = vcmp.eq.s32.totalorder %v1224, 0
    %v1343 = vsel %vm1342, %v1341, %v1337
    %1344 = vst [vmem:[#allocation20] sm:$0x3] %v1343
    // Predicated region
    $region118: #{tpu_custom_call.1} parent=1 // pred_check
      _
    $region119: #{tpu_custom_call.1} parent=1 // pred_check_branch
      %1346 = sbr.rel (0) target = $region121
    $region120: #{tpu_custom_call.1} parent=1 // pred_region
      %s1348 = ssub.s32 32, 32
      %1349 = vsyncadd [#allocation4], %s1348
      %s1351 = sshll.u32 [#allocation20], 4
      %s1352 = int_to_ptr.vmem [resolvable:$true] %s1351
      %1354 = dma.vmem_to_hbm [thread:$0]  %s1352, 32, %s18, [#allocation4]
    $region121: #{tpu_custom_call.1} parent=1 // pred_fallthru
      _
    // Predicated region
    $region122: #{tpu_custom_call.1} parent=1 // pred_check
      _
    $region123: #{tpu_custom_call.1} parent=1 // pred_check_branch
      %1356 = sbr.rel (0) target = $region125
    $region124: #{tpu_custom_call.1} parent=1 // pred_region
      %1357 = dma.done [#allocation4], 32
    $region125: #{tpu_custom_call.1} parent=1 // pred_fallthru
      _
    %1358 = vsyncpa [#allocation3], 1
    %1359 = vsyncpa [#allocation6], 1
    %1360 = vsyncpa [#allocation9], 1
    %1361 = vsyncpa [#allocation12], 1
    %1362 = vsyncpa [#allocation15], 1
    %1363 = vsyncpa [#allocation18], 1
    %1364 = vsyncpa [#allocation4], 1

</llo_original>
